<compile_context>
chip_gen: v6e
topology: v6e:2x2x1
jax: 0.10.0
libtpu: 0.0.40
codegen_flags: <defaults>
</compile_context>

<pallas_src>
import jax
import jax.numpy as jnp
from jax.experimental import pallas as pl
from jax.experimental.pallas import tpu as pltpu


def lstm_kernel(x_ref, wih_ref, whh_ref, b_ref, hout_ref, xg_ref):
    """x_ref:(T*Bp,E) wih:(E,4Hp) whh:(Hp,4Hp) b:(1,4Hp) -> hout:(Bp,Hp)."""
    TB, _ = x_ref.shape
    Hp = whh_ref.shape[0]
    Bp = hout_ref.shape[0]
    T = TB // Bp

    # Pre-pass: input projection + folded bias for all T timesteps in ONE
    # big MXU matmul, hoisted off the serial recurrence critical path.
    xg_ref[...] = (
        jnp.dot(x_ref[...], wih_ref[...], preferred_element_type=jnp.float32)
        + b_ref[...])

    whh = whh_ref[...]  # load once; reused every step

    def step(t, carry):
        h, c = carry
        off = pl.multiple_of(t * Bp, 8)
        gates = xg_ref[pl.ds(off, Bp), :] + jnp.dot(
            h, whh, preferred_element_type=jnp.float32)        # (Bp, 4Hp)
        # Hp == 128 -> each gate slice is a whole 128-lane vreg (no XLU shuffle).
        i_g = jax.nn.sigmoid(gates[:, 0 * Hp:1 * Hp])
        f_g = jax.nn.sigmoid(gates[:, 1 * Hp:2 * Hp])
        g_g = jnp.tanh(gates[:, 2 * Hp:3 * Hp])
        o_g = jax.nn.sigmoid(gates[:, 3 * Hp:4 * Hp])
        c_new = f_g * c + i_g * g_g
        h_new = o_g * jnp.tanh(c_new)
        return h_new, c_new

    h0 = jnp.zeros((Bp, Hp), jnp.float32)
    c0 = jnp.zeros((Bp, Hp), jnp.float32)
    h_final, _ = jax.lax.fori_loop(0, T, step, (h0, c0), unroll=True)
    hout_ref[...] = h_final   # lane-dense (Bp, 128) store


def _pad_gate_cols(w, H, Hp):
    """(..., 4*H) -> (..., 4*Hp): zero-pad each PyTorch gate block [i|f|g|o]."""
    lead = w.shape[:-1]
    w4 = w.reshape(lead + (4, H))
    pad = [(0, 0)] * len(lead) + [(0, 0), (0, Hp - H)]
    return jnp.pad(w4, pad).reshape(lead + (4 * Hp,))


def rnn_forward(x_tokens, params):
    """x_tokens: (B, T) int32 token ids. Returns logits (B, 4) float32."""
    emb = params["embedding"]          # (V, E)
    wih_t = params["wih_t"]            # (E, 4H)
    whh_t = params["whh_t"]            # (H, 4H)
    b = params["b"]                    # (1, 4H)   (b_ih + b_hh folded)
    wout_t = params["wout_t"]          # (H, C)
    bout = params["bout"]              # (1, C)

    B, T = x_tokens.shape
    E = emb.shape[1]
    H = whh_t.shape[0]

    SUB, LANE = 8, 128
    Bp = max(SUB, ((B + SUB - 1) // SUB) * SUB)       # pad batch to sublanes
    Hp = max(LANE, ((H + LANE - 1) // LANE) * LANE)   # pad hidden to lanes

    # Lane-aligned gate layout: each gate occupies a full Hp-lane block.
    # Padded hidden units get zero weights + zero bias, so their cell/hidden
    # state stays exactly 0.0 through the whole recurrence (exact semantics).
    wih_p = _pad_gate_cols(wih_t, H, Hp).astype(jnp.float32)                  # (E, 4Hp)
    whh_p = _pad_gate_cols(jnp.pad(whh_t, ((0, Hp - H), (0, 0))), H, Hp)      # (Hp, 4Hp)
    whh_p = whh_p.astype(jnp.float32)
    b_p = _pad_gate_cols(b, H, Hp).astype(jnp.float32)                        # (1, 4Hp)

    # Embedding lookup (XLA glue), time-major, batch padded, flattened so the
    # kernel's input projection is a single MXU matmul.
    # TODO(synk): for a realistic vocab, fuse the gather via scalar-prefetched
    # token ids + a pl.Element row-gather BlockSpec instead of materializing xe.
    xe = jnp.take(emb, x_tokens, axis=0)               # (B, T, E)
    xe = jnp.transpose(xe, (1, 0, 2))                  # (T, B, E)
    xe = jnp.pad(xe, ((0, 0), (0, Bp - B), (0, 0)))    # (T, Bp, E)
    xe = xe.reshape(T * Bp, E).astype(jnp.float32)

    h_final = pl.pallas_call(
        lstm_kernel,
        out_shape=jax.ShapeDtypeStruct((Bp, Hp), jnp.float32),
        in_specs=[pl.BlockSpec(memory_space=pltpu.MemorySpace.VMEM)] * 4,
        out_specs=pl.BlockSpec(memory_space=pltpu.MemorySpace.VMEM),
        scratch_shapes=[pltpu.VMEM((T * Bp, 4 * Hp), jnp.float32)],
    )(xe, wih_p, whh_p, b_p)

    # Dropout is identity in eval mode; the 4-class head is a tiny GEMV kept
    # in XLA so the kernel output stays lane-dense instead of width-4.
    # TODO(synk): training-mode dropout (p=0.5) would need pltpu PRNG masking.
    h_last = h_final[:B, :H]
    return h_last @ wout_t + bout


def rnn_reference(x_tokens, params):
    """Pure-JAX reference of the PyTorch forward (eval mode)."""
    emb = params["embedding"]
    wih_t, whh_t, b = params["wih_t"], params["whh_t"], params["b"]
    wout_t, bout = params["wout_t"], params["bout"]
    H = whh_t.shape[0]

    xe = jnp.take(emb, x_tokens, axis=0)          # (B, T, E)
    B, T, _ = xe.shape
    h = jnp.zeros((B, H), jnp.float32)
    c = jnp.zeros((B, H), jnp.float32)

    def step(carry, x_t):
        h, c = carry
        gates = x_t @ wih_t + h @ whh_t + b
        i = jax.nn.sigmoid(gates[:, 0 * H:1 * H])
        f = jax.nn.sigmoid(gates[:, 1 * H:2 * H])
        g = jnp.tanh(gates[:, 2 * H:3 * H])
        o = jax.nn.sigmoid(gates[:, 3 * H:4 * H])
        c = f * c + i * g
        h = o * jnp.tanh(c)
        return (h, c), None

    (h, _), _ = jax.lax.scan(step, (h, c), jnp.transpose(xe, (1, 0, 2)))
    return h @ wout_t + bout


def init_params(key, vocab=50, E=32, H=64, n_classes=4):
    ks = jax.random.split(key, 6)
    s = 1.0 / jnp.sqrt(H)
    return {
        "embedding": jax.random.normal(ks[0], (vocab, E), jnp.float32),
        # stored pre-transposed relative to PyTorch layout (4H, E) / (4H, H)
        "wih_t": jax.random.uniform(ks[1], (E, 4 * H), jnp.float32, -s, s),
        "whh_t": jax.random.uniform(ks[2], (H, 4 * H), jnp.float32, -s, s),
        # b_ih + b_hh folded into one bias
        "b": jax.random.uniform(ks[3], (1, 4 * H), jnp.float32, -s, s),
        "wout_t": jax.random.uniform(ks[4], (H, n_classes), jnp.float32, -s, s),
        "bout": jax.random.uniform(ks[5], (1, n_classes), jnp.float32, -s, s),
    }


if __name__ == "__main__":
    key = jax.random.PRNGKey(0)
    kp, kx = jax.random.split(key)

    VOCAB, E, H = 50, 32, 64
    B, T = 2, 8

    params = init_params(kp, vocab=VOCAB, E=E, H=H, n_classes=4)
    x_tokens = jax.random.randint(kx, (B, T), 0, VOCAB, dtype=jnp.int32)

    logits = jax.block_until_ready(rnn_forward(x_tokens, params))
    ref = jax.block_until_ready(rnn_reference(x_tokens, params))

    assert logits.shape == (B, 4)
    assert jnp.allclose(logits, ref, rtol=1e-2, atol=1e-2)
    print("KERNEL_OK")
</pallas_src>

<mosaic_0001>
module attributes {stable_mosaic.version = 11 : i64} {
  func.func @lstm_kernel(%arg0: memref<64x32xf32, #tpu.memory_space<vmem>>, %arg1: memref<32x512xf32, #tpu.memory_space<vmem>>, %arg2: memref<128x512xf32, #tpu.memory_space<vmem>>, %arg3: memref<1x512xf32, #tpu.memory_space<vmem>>, %arg4: memref<8x128xf32, #tpu.memory_space<vmem>>, %arg5: memref<64x512xf32, #tpu.memory_space<vmem>>) attributes {dimension_semantics = [], scalar_prefetch = 0 : i64, scratch_operands = 1 : i64, tpu.core_type = #tpu.core_type<tc>} {
    %c0 = arith.constant 0 : index
    %c0_0 = arith.constant 0 : index
    %0 = vector.load %arg0[%c0, %c0_0] : memref<64x32xf32, #tpu.memory_space<vmem>>, vector<64x32xf32>
    %c0_1 = arith.constant 0 : index
    %c0_2 = arith.constant 0 : index
    %1 = vector.load %arg1[%c0_1, %c0_2] : memref<32x512xf32, #tpu.memory_space<vmem>>, vector<32x512xf32>
    %cst = arith.constant dense<0.000000e+00> : vector<64x512xf32>
    %2 = tpu.matmul %0, %1, %cst {dimension_numbers = #tpu.dot_dimension_numbers<[1], [0], [0], [1], [0, 0, 1, 1], [], []>} : vector<64x32xf32>, vector<32x512xf32>, vector<64x512xf32> -> vector<64x512xf32>
    %c0_3 = arith.constant 0 : index
    %c0_4 = arith.constant 0 : index
    %3 = vector.load %arg3[%c0_3, %c0_4] : memref<1x512xf32, #tpu.memory_space<vmem>>, vector<1x512xf32>
    %4 = vector.broadcast %3 : vector<1x512xf32> to vector<64x512xf32>
    %5 = arith.addf %2, %4 : vector<64x512xf32>
    %c0_5 = arith.constant 0 : index
    %c0_6 = arith.constant 0 : index
    %6 = vector.load %arg5[%c0_5, %c0_6] : memref<64x512xf32, #tpu.memory_space<vmem>>, vector<64x512xf32>
    tpu.vector_store %arg5[%c0_5, %c0_6], %5 {strides = array<i32>} : memref<64x512xf32, #tpu.memory_space<vmem>>, vector<64x512xf32>,
    %c0_7 = arith.constant 0 : index
    %c0_8 = arith.constant 0 : index
    %7 = vector.load %arg2[%c0_7, %c0_8] : memref<128x512xf32, #tpu.memory_space<vmem>>, vector<128x512xf32>
    %cst_9 = arith.constant 0.000000e+00 : f32
    %8 = vector.broadcast %cst_9 : f32 to vector<8x128xf32>
    %cst_10 = arith.constant 0.000000e+00 : f32
    %9 = vector.broadcast %cst_10 : f32 to vector<8x128xf32>
    %c0_i32 = arith.constant 0 : i32
    %c8_i32 = arith.constant 8 : i32
    %10 = arith.muli %c0_i32, %c8_i32 : i32
    %11 = tpu.assume_multiple %10, 8 : i32
    %12 = arith.index_cast %11 : i32 to index
    %c0_11 = arith.constant 0 : index
    %13 = vector.load %arg5[%12, %c0_11] : memref<64x512xf32, #tpu.memory_space<vmem>>, vector<8x512xf32>
    %cst_12 = arith.constant dense<0.000000e+00> : vector<8x512xf32>
    %14 = tpu.matmul %8, %7, %cst_12 {dimension_numbers = #tpu.dot_dimension_numbers<[1], [0], [0], [1], [0, 0, 1, 1], [], []>} : vector<8x128xf32>, vector<128x512xf32>, vector<8x512xf32> -> vector<8x512xf32>
    %15 = arith.addf %13, %14 : vector<8x512xf32>
    %16 = vector.extract_strided_slice %15 {offsets = [0, 0], sizes = [8, 128], strides = [1, 1]} : vector<8x512xf32> to vector<8x128xf32>
    %17 = arith.negf %16 : vector<8x128xf32>
    %18 = math.exp %17 : vector<8x128xf32>
    %cst_13 = arith.constant 1.000000e+00 : f32
    %19 = vector.broadcast %cst_13 : f32 to vector<8x128xf32>
    %20 = arith.addf %19, %18 : vector<8x128xf32>
    %21 = arith.divf %19, %20 : vector<8x128xf32>
    %22 = vector.extract_strided_slice %15 {offsets = [0, 128], sizes = [8, 128], strides = [1, 1]} : vector<8x512xf32> to vector<8x128xf32>
    %23 = arith.negf %22 : vector<8x128xf32>
    %24 = math.exp %23 : vector<8x128xf32>
    %cst_14 = arith.constant 1.000000e+00 : f32
    %25 = vector.broadcast %cst_14 : f32 to vector<8x128xf32>
    %26 = arith.addf %25, %24 : vector<8x128xf32>
    %27 = arith.divf %25, %26 : vector<8x128xf32>
    %28 = vector.extract_strided_slice %15 {offsets = [0, 256], sizes = [8, 128], strides = [1, 1]} : vector<8x512xf32> to vector<8x128xf32>
    %29 = math.tanh %28 : vector<8x128xf32>
    %30 = vector.extract_strided_slice %15 {offsets = [0, 384], sizes = [8, 128], strides = [1, 1]} : vector<8x512xf32> to vector<8x128xf32>
    %31 = arith.negf %30 : vector<8x128xf32>
    %32 = math.exp %31 : vector<8x128xf32>
    %cst_15 = arith.constant 1.000000e+00 : f32
    %33 = vector.broadcast %cst_15 : f32 to vector<8x128xf32>
    %34 = arith.addf %33, %32 : vector<8x128xf32>
    %35 = arith.divf %33, %34 : vector<8x128xf32>
    %36 = arith.mulf %27, %9 : vector<8x128xf32>
    %37 = arith.mulf %21, %29 : vector<8x128xf32>
    %38 = arith.addf %36, %37 : vector<8x128xf32>
    %39 = math.tanh %38 : vector<8x128xf32>
    %40 = arith.mulf %35, %39 : vector<8x128xf32>
    %c1_i32 = arith.constant 1 : i32
    %c8_i32_16 = arith.constant 8 : i32
    %41 = arith.muli %c1_i32, %c8_i32_16 : i32
    %42 = tpu.assume_multiple %41, 8 : i32
    %43 = arith.index_cast %42 : i32 to index
    %c0_17 = arith.constant 0 : index
    %44 = vector.load %arg5[%43, %c0_17] : memref<64x512xf32, #tpu.memory_space<vmem>>, vector<8x512xf32>
    %cst_18 = arith.constant dense<0.000000e+00> : vector<8x512xf32>
    %45 = tpu.matmul %40, %7, %cst_18 {dimension_numbers = #tpu.dot_dimension_numbers<[1], [0], [0], [1], [0, 0, 1, 1], [], []>} : vector<8x128xf32>, vector<128x512xf32>, vector<8x512xf32> -> vector<8x512xf32>
    %46 = arith.addf %44, %45 : vector<8x512xf32>
    %47 = vector.extract_strided_slice %46 {offsets = [0, 0], sizes = [8, 128], strides = [1, 1]} : vector<8x512xf32> to vector<8x128xf32>
    %48 = arith.negf %47 : vector<8x128xf32>
    %49 = math.exp %48 : vector<8x128xf32>
    %cst_19 = arith.constant 1.000000e+00 : f32
    %50 = vector.broadcast %cst_19 : f32 to vector<8x128xf32>
    %51 = arith.addf %50, %49 : vector<8x128xf32>
    %52 = arith.divf %50, %51 : vector<8x128xf32>
    %53 = vector.extract_strided_slice %46 {offsets = [0, 128], sizes = [8, 128], strides = [1, 1]} : vector<8x512xf32> to vector<8x128xf32>
    %54 = arith.negf %53 : vector<8x128xf32>
    %55 = math.exp %54 : vector<8x128xf32>
    %cst_20 = arith.constant 1.000000e+00 : f32
    %56 = vector.broadcast %cst_20 : f32 to vector<8x128xf32>
    %57 = arith.addf %56, %55 : vector<8x128xf32>
    %58 = arith.divf %56, %57 : vector<8x128xf32>
    %59 = vector.extract_strided_slice %46 {offsets = [0, 256], sizes = [8, 128], strides = [1, 1]} : vector<8x512xf32> to vector<8x128xf32>
    %60 = math.tanh %59 : vector<8x128xf32>
    %61 = vector.extract_strided_slice %46 {offsets = [0, 384], sizes = [8, 128], strides = [1, 1]} : vector<8x512xf32> to vector<8x128xf32>
    %62 = arith.negf %61 : vector<8x128xf32>
    %63 = math.exp %62 : vector<8x128xf32>
    %cst_21 = arith.constant 1.000000e+00 : f32
    %64 = vector.broadcast %cst_21 : f32 to vector<8x128xf32>
    %65 = arith.addf %64, %63 : vector<8x128xf32>
    %66 = arith.divf %64, %65 : vector<8x128xf32>
    %67 = arith.mulf %58, %38 : vector<8x128xf32>
    %68 = arith.mulf %52, %60 : vector<8x128xf32>
    %69 = arith.addf %67, %68 : vector<8x128xf32>
    %70 = math.tanh %69 : vector<8x128xf32>
    %71 = arith.mulf %66, %70 : vector<8x128xf32>
    %c2_i32 = arith.constant 2 : i32
    %c8_i32_22 = arith.constant 8 : i32
    %72 = arith.muli %c2_i32, %c8_i32_22 : i32
    %73 = tpu.assume_multiple %72, 8 : i32
    %74 = arith.index_cast %73 : i32 to index
    %c0_23 = arith.constant 0 : index
    %75 = vector.load %arg5[%74, %c0_23] : memref<64x512xf32, #tpu.memory_space<vmem>>, vector<8x512xf32>
    %cst_24 = arith.constant dense<0.000000e+00> : vector<8x512xf32>
    %76 = tpu.matmul %71, %7, %cst_24 {dimension_numbers = #tpu.dot_dimension_numbers<[1], [0], [0], [1], [0, 0, 1, 1], [], []>} : vector<8x128xf32>, vector<128x512xf32>, vector<8x512xf32> -> vector<8x512xf32>
    %77 = arith.addf %75, %76 : vector<8x512xf32>
    %78 = vector.extract_strided_slice %77 {offsets = [0, 0], sizes = [8, 128], strides = [1, 1]} : vector<8x512xf32> to vector<8x128xf32>
    %79 = arith.negf %78 : vector<8x128xf32>
    %80 = math.exp %79 : vector<8x128xf32>
    %cst_25 = arith.constant 1.000000e+00 : f32
    %81 = vector.broadcast %cst_25 : f32 to vector<8x128xf32>
    %82 = arith.addf %81, %80 : vector<8x128xf32>
    %83 = arith.divf %81, %82 : vector<8x128xf32>
    %84 = vector.extract_strided_slice %77 {offsets = [0, 128], sizes = [8, 128], strides = [1, 1]} : vector<8x512xf32> to vector<8x128xf32>
    %85 = arith.negf %84 : vector<8x128xf32>
    %86 = math.exp %85 : vector<8x128xf32>
    %cst_26 = arith.constant 1.000000e+00 : f32
    %87 = vector.broadcast %cst_26 : f32 to vector<8x128xf32>
    %88 = arith.addf %87, %86 : vector<8x128xf32>
    %89 = arith.divf %87, %88 : vector<8x128xf32>
    %90 = vector.extract_strided_slice %77 {offsets = [0, 256], sizes = [8, 128], strides = [1, 1]} : vector<8x512xf32> to vector<8x128xf32>
    %91 = math.tanh %90 : vector<8x128xf32>
    %92 = vector.extract_strided_slice %77 {offsets = [0, 384], sizes = [8, 128], strides = [1, 1]} : vector<8x512xf32> to vector<8x128xf32>
    %93 = arith.negf %92 : vector<8x128xf32>
    %94 = math.exp %93 : vector<8x128xf32>
    %cst_27 = arith.constant 1.000000e+00 : f32
    %95 = vector.broadcast %cst_27 : f32 to vector<8x128xf32>
    %96 = arith.addf %95, %94 : vector<8x128xf32>
    %97 = arith.divf %95, %96 : vector<8x128xf32>
    %98 = arith.mulf %89, %69 : vector<8x128xf32>
    %99 = arith.mulf %83, %91 : vector<8x128xf32>
    %100 = arith.addf %98, %99 : vector<8x128xf32>
    %101 = math.tanh %100 : vector<8x128xf32>
    %102 = arith.mulf %97, %101 : vector<8x128xf32>
    %c3_i32 = arith.constant 3 : i32
    %c8_i32_28 = arith.constant 8 : i32
    %103 = arith.muli %c3_i32, %c8_i32_28 : i32
    %104 = tpu.assume_multiple %103, 8 : i32
    %105 = arith.index_cast %104 : i32 to index
    %c0_29 = arith.constant 0 : index
    %106 = vector.load %arg5[%105, %c0_29] : memref<64x512xf32, #tpu.memory_space<vmem>>, vector<8x512xf32>
    %cst_30 = arith.constant dense<0.000000e+00> : vector<8x512xf32>
    %107 = tpu.matmul %102, %7, %cst_30 {dimension_numbers = #tpu.dot_dimension_numbers<[1], [0], [0], [1], [0, 0, 1, 1], [], []>} : vector<8x128xf32>, vector<128x512xf32>, vector<8x512xf32> -> vector<8x512xf32>
    %108 = arith.addf %106, %107 : vector<8x512xf32>
    %109 = vector.extract_strided_slice %108 {offsets = [0, 0], sizes = [8, 128], strides = [1, 1]} : vector<8x512xf32> to vector<8x128xf32>
    %110 = arith.negf %109 : vector<8x128xf32>
    %111 = math.exp %110 : vector<8x128xf32>
    %cst_31 = arith.constant 1.000000e+00 : f32
    %112 = vector.broadcast %cst_31 : f32 to vector<8x128xf32>
    %113 = arith.addf %112, %111 : vector<8x128xf32>
    %114 = arith.divf %112, %113 : vector<8x128xf32>
    %115 = vector.extract_strided_slice %108 {offsets = [0, 128], sizes = [8, 128], strides = [1, 1]} : vector<8x512xf32> to vector<8x128xf32>
    %116 = arith.negf %115 : vector<8x128xf32>
    %117 = math.exp %116 : vector<8x128xf32>
    %cst_32 = arith.constant 1.000000e+00 : f32
    %118 = vector.broadcast %cst_32 : f32 to vector<8x128xf32>
    %119 = arith.addf %118, %117 : vector<8x128xf32>
    %120 = arith.divf %118, %119 : vector<8x128xf32>
    %121 = vector.extract_strided_slice %108 {offsets = [0, 256], sizes = [8, 128], strides = [1, 1]} : vector<8x512xf32> to vector<8x128xf32>
    %122 = math.tanh %121 : vector<8x128xf32>
    %123 = vector.extract_strided_slice %108 {offsets = [0, 384], sizes = [8, 128], strides = [1, 1]} : vector<8x512xf32> to vector<8x128xf32>
    %124 = arith.negf %123 : vector<8x128xf32>
    %125 = math.exp %124 : vector<8x128xf32>
    %cst_33 = arith.constant 1.000000e+00 : f32
    %126 = vector.broadcast %cst_33 : f32 to vector<8x128xf32>
    %127 = arith.addf %126, %125 : vector<8x128xf32>
    %128 = arith.divf %126, %127 : vector<8x128xf32>
    %129 = arith.mulf %120, %100 : vector<8x128xf32>
    %130 = arith.mulf %114, %122 : vector<8x128xf32>
    %131 = arith.addf %129, %130 : vector<8x128xf32>
    %132 = math.tanh %131 : vector<8x128xf32>
    %133 = arith.mulf %128, %132 : vector<8x128xf32>
    %c4_i32 = arith.constant 4 : i32
    %c8_i32_34 = arith.constant 8 : i32
    %134 = arith.muli %c4_i32, %c8_i32_34 : i32
    %135 = tpu.assume_multiple %134, 8 : i32
    %136 = arith.index_cast %135 : i32 to index
    %c0_35 = arith.constant 0 : index
    %137 = vector.load %arg5[%136, %c0_35] : memref<64x512xf32, #tpu.memory_space<vmem>>, vector<8x512xf32>
    %cst_36 = arith.constant dense<0.000000e+00> : vector<8x512xf32>
    %138 = tpu.matmul %133, %7, %cst_36 {dimension_numbers = #tpu.dot_dimension_numbers<[1], [0], [0], [1], [0, 0, 1, 1], [], []>} : vector<8x128xf32>, vector<128x512xf32>, vector<8x512xf32> -> vector<8x512xf32>
    %139 = arith.addf %137, %138 : vector<8x512xf32>
    %140 = vector.extract_strided_slice %139 {offsets = [0, 0], sizes = [8, 128], strides = [1, 1]} : vector<8x512xf32> to vector<8x128xf32>
    %141 = arith.negf %140 : vector<8x128xf32>
    %142 = math.exp %141 : vector<8x128xf32>
    %cst_37 = arith.constant 1.000000e+00 : f32
    %143 = vector.broadcast %cst_37 : f32 to vector<8x128xf32>
    %144 = arith.addf %143, %142 : vector<8x128xf32>
    %145 = arith.divf %143, %144 : vector<8x128xf32>
    %146 = vector.extract_strided_slice %139 {offsets = [0, 128], sizes = [8, 128], strides = [1, 1]} : vector<8x512xf32> to vector<8x128xf32>
    %147 = arith.negf %146 : vector<8x128xf32>
    %148 = math.exp %147 : vector<8x128xf32>
    %cst_38 = arith.constant 1.000000e+00 : f32
    %149 = vector.broadcast %cst_38 : f32 to vector<8x128xf32>
    %150 = arith.addf %149, %148 : vector<8x128xf32>
    %151 = arith.divf %149, %150 : vector<8x128xf32>
    %152 = vector.extract_strided_slice %139 {offsets = [0, 256], sizes = [8, 128], strides = [1, 1]} : vector<8x512xf32> to vector<8x128xf32>
    %153 = math.tanh %152 : vector<8x128xf32>
    %154 = vector.extract_strided_slice %139 {offsets = [0, 384], sizes = [8, 128], strides = [1, 1]} : vector<8x512xf32> to vector<8x128xf32>
    %155 = arith.negf %154 : vector<8x128xf32>
    %156 = math.exp %155 : vector<8x128xf32>
    %cst_39 = arith.constant 1.000000e+00 : f32
    %157 = vector.broadcast %cst_39 : f32 to vector<8x128xf32>
    %158 = arith.addf %157, %156 : vector<8x128xf32>
    %159 = arith.divf %157, %158 : vector<8x128xf32>
    %160 = arith.mulf %151, %131 : vector<8x128xf32>
    %161 = arith.mulf %145, %153 : vector<8x128xf32>
    %162 = arith.addf %160, %161 : vector<8x128xf32>
    %163 = math.tanh %162 : vector<8x128xf32>
    %164 = arith.mulf %159, %163 : vector<8x128xf32>
    %c5_i32 = arith.constant 5 : i32
    %c8_i32_40 = arith.constant 8 : i32
    %165 = arith.muli %c5_i32, %c8_i32_40 : i32
    %166 = tpu.assume_multiple %165, 8 : i32
    %167 = arith.index_cast %166 : i32 to index
    %c0_41 = arith.constant 0 : index
    %168 = vector.load %arg5[%167, %c0_41] : memref<64x512xf32, #tpu.memory_space<vmem>>, vector<8x512xf32>
    %cst_42 = arith.constant dense<0.000000e+00> : vector<8x512xf32>
    %169 = tpu.matmul %164, %7, %cst_42 {dimension_numbers = #tpu.dot_dimension_numbers<[1], [0], [0], [1], [0, 0, 1, 1], [], []>} : vector<8x128xf32>, vector<128x512xf32>, vector<8x512xf32> -> vector<8x512xf32>
    %170 = arith.addf %168, %169 : vector<8x512xf32>
    %171 = vector.extract_strided_slice %170 {offsets = [0, 0], sizes = [8, 128], strides = [1, 1]} : vector<8x512xf32> to vector<8x128xf32>
    %172 = arith.negf %171 : vector<8x128xf32>
    %173 = math.exp %172 : vector<8x128xf32>
    %cst_43 = arith.constant 1.000000e+00 : f32
    %174 = vector.broadcast %cst_43 : f32 to vector<8x128xf32>
    %175 = arith.addf %174, %173 : vector<8x128xf32>
    %176 = arith.divf %174, %175 : vector<8x128xf32>
    %177 = vector.extract_strided_slice %170 {offsets = [0, 128], sizes = [8, 128], strides = [1, 1]} : vector<8x512xf32> to vector<8x128xf32>
    %178 = arith.negf %177 : vector<8x128xf32>
    %179 = math.exp %178 : vector<8x128xf32>
    %cst_44 = arith.constant 1.000000e+00 : f32
    %180 = vector.broadcast %cst_44 : f32 to vector<8x128xf32>
    %181 = arith.addf %180, %179 : vector<8x128xf32>
    %182 = arith.divf %180, %181 : vector<8x128xf32>
    %183 = vector.extract_strided_slice %170 {offsets = [0, 256], sizes = [8, 128], strides = [1, 1]} : vector<8x512xf32> to vector<8x128xf32>
    %184 = math.tanh %183 : vector<8x128xf32>
    %185 = vector.extract_strided_slice %170 {offsets = [0, 384], sizes = [8, 128], strides = [1, 1]} : vector<8x512xf32> to vector<8x128xf32>
    %186 = arith.negf %185 : vector<8x128xf32>
    %187 = math.exp %186 : vector<8x128xf32>
    %cst_45 = arith.constant 1.000000e+00 : f32
    %188 = vector.broadcast %cst_45 : f32 to vector<8x128xf32>
    %189 = arith.addf %188, %187 : vector<8x128xf32>
    %190 = arith.divf %188, %189 : vector<8x128xf32>
    %191 = arith.mulf %182, %162 : vector<8x128xf32>
    %192 = arith.mulf %176, %184 : vector<8x128xf32>
    %193 = arith.addf %191, %192 : vector<8x128xf32>
    %194 = math.tanh %193 : vector<8x128xf32>
    %195 = arith.mulf %190, %194 : vector<8x128xf32>
    %c6_i32 = arith.constant 6 : i32
    %c8_i32_46 = arith.constant 8 : i32
    %196 = arith.muli %c6_i32, %c8_i32_46 : i32
    %197 = tpu.assume_multiple %196, 8 : i32
    %198 = arith.index_cast %197 : i32 to index
    %c0_47 = arith.constant 0 : index
    %199 = vector.load %arg5[%198, %c0_47] : memref<64x512xf32, #tpu.memory_space<vmem>>, vector<8x512xf32>
    %cst_48 = arith.constant dense<0.000000e+00> : vector<8x512xf32>
    %200 = tpu.matmul %195, %7, %cst_48 {dimension_numbers = #tpu.dot_dimension_numbers<[1], [0], [0], [1], [0, 0, 1, 1], [], []>} : vector<8x128xf32>, vector<128x512xf32>, vector<8x512xf32> -> vector<8x512xf32>
    %201 = arith.addf %199, %200 : vector<8x512xf32>
    %202 = vector.extract_strided_slice %201 {offsets = [0, 0], sizes = [8, 128], strides = [1, 1]} : vector<8x512xf32> to vector<8x128xf32>
    %203 = arith.negf %202 : vector<8x128xf32>
    %204 = math.exp %203 : vector<8x128xf32>
    %cst_49 = arith.constant 1.000000e+00 : f32
    %205 = vector.broadcast %cst_49 : f32 to vector<8x128xf32>
    %206 = arith.addf %205, %204 : vector<8x128xf32>
    %207 = arith.divf %205, %206 : vector<8x128xf32>
    %208 = vector.extract_strided_slice %201 {offsets = [0, 128], sizes = [8, 128], strides = [1, 1]} : vector<8x512xf32> to vector<8x128xf32>
    %209 = arith.negf %208 : vector<8x128xf32>
    %210 = math.exp %209 : vector<8x128xf32>
    %cst_50 = arith.constant 1.000000e+00 : f32
    %211 = vector.broadcast %cst_50 : f32 to vector<8x128xf32>
    %212 = arith.addf %211, %210 : vector<8x128xf32>
    %213 = arith.divf %211, %212 : vector<8x128xf32>
    %214 = vector.extract_strided_slice %201 {offsets = [0, 256], sizes = [8, 128], strides = [1, 1]} : vector<8x512xf32> to vector<8x128xf32>
    %215 = math.tanh %214 : vector<8x128xf32>
    %216 = vector.extract_strided_slice %201 {offsets = [0, 384], sizes = [8, 128], strides = [1, 1]} : vector<8x512xf32> to vector<8x128xf32>
    %217 = arith.negf %216 : vector<8x128xf32>
    %218 = math.exp %217 : vector<8x128xf32>
    %cst_51 = arith.constant 1.000000e+00 : f32
    %219 = vector.broadcast %cst_51 : f32 to vector<8x128xf32>
    %220 = arith.addf %219, %218 : vector<8x128xf32>
    %221 = arith.divf %219, %220 : vector<8x128xf32>
    %222 = arith.mulf %213, %193 : vector<8x128xf32>
    %223 = arith.mulf %207, %215 : vector<8x128xf32>
    %224 = arith.addf %222, %223 : vector<8x128xf32>
    %225 = math.tanh %224 : vector<8x128xf32>
    %226 = arith.mulf %221, %225 : vector<8x128xf32>
    %c7_i32 = arith.constant 7 : i32
    %c8_i32_52 = arith.constant 8 : i32
    %227 = arith.muli %c7_i32, %c8_i32_52 : i32
    %228 = tpu.assume_multiple %227, 8 : i32
    %229 = arith.index_cast %228 : i32 to index
    %c0_53 = arith.constant 0 : index
    %230 = vector.load %arg5[%229, %c0_53] : memref<64x512xf32, #tpu.memory_space<vmem>>, vector<8x512xf32>
    %cst_54 = arith.constant dense<0.000000e+00> : vector<8x512xf32>
    %231 = tpu.matmul %226, %7, %cst_54 {dimension_numbers = #tpu.dot_dimension_numbers<[1], [0], [0], [1], [0, 0, 1, 1], [], []>} : vector<8x128xf32>, vector<128x512xf32>, vector<8x512xf32> -> vector<8x512xf32>
    %232 = arith.addf %230, %231 : vector<8x512xf32>
    %233 = vector.extract_strided_slice %232 {offsets = [0, 0], sizes = [8, 128], strides = [1, 1]} : vector<8x512xf32> to vector<8x128xf32>
    %234 = arith.negf %233 : vector<8x128xf32>
    %235 = math.exp %234 : vector<8x128xf32>
    %cst_55 = arith.constant 1.000000e+00 : f32
    %236 = vector.broadcast %cst_55 : f32 to vector<8x128xf32>
    %237 = arith.addf %236, %235 : vector<8x128xf32>
    %238 = arith.divf %236, %237 : vector<8x128xf32>
    %239 = vector.extract_strided_slice %232 {offsets = [0, 128], sizes = [8, 128], strides = [1, 1]} : vector<8x512xf32> to vector<8x128xf32>
    %240 = arith.negf %239 : vector<8x128xf32>
    %241 = math.exp %240 : vector<8x128xf32>
    %cst_56 = arith.constant 1.000000e+00 : f32
    %242 = vector.broadcast %cst_56 : f32 to vector<8x128xf32>
    %243 = arith.addf %242, %241 : vector<8x128xf32>
    %244 = arith.divf %242, %243 : vector<8x128xf32>
    %245 = vector.extract_strided_slice %232 {offsets = [0, 256], sizes = [8, 128], strides = [1, 1]} : vector<8x512xf32> to vector<8x128xf32>
    %246 = math.tanh %245 : vector<8x128xf32>
    %247 = vector.extract_strided_slice %232 {offsets = [0, 384], sizes = [8, 128], strides = [1, 1]} : vector<8x512xf32> to vector<8x128xf32>
    %248 = arith.negf %247 : vector<8x128xf32>
    %249 = math.exp %248 : vector<8x128xf32>
    %cst_57 = arith.constant 1.000000e+00 : f32
    %250 = vector.broadcast %cst_57 : f32 to vector<8x128xf32>
    %251 = arith.addf %250, %249 : vector<8x128xf32>
    %252 = arith.divf %250, %251 : vector<8x128xf32>
    %253 = arith.mulf %244, %224 : vector<8x128xf32>
    %254 = arith.mulf %238, %246 : vector<8x128xf32>
    %255 = arith.addf %253, %254 : vector<8x128xf32>
    %256 = math.tanh %255 : vector<8x128xf32>
    %257 = arith.mulf %252, %256 : vector<8x128xf32>
    %c8_i32_58 = arith.constant 8 : i32
    %c0_59 = arith.constant 0 : index
    %c0_60 = arith.constant 0 : index
    %258 = vector.load %arg4[%c0_59, %c0_60] : memref<8x128xf32, #tpu.memory_space<vmem>>, vector<8x128xf32>
    tpu.vector_store %arg4[%c0_59, %c0_60], %257 {strides = array<i32>} : memref<8x128xf32, #tpu.memory_space<vmem>>, vector<8x128xf32>,
    return
  }
}

</mosaic_0001>

<llo_original>
// kernel: tpu_custom_call.1
$region0: #{tpu_custom_call.1}
  #allocation0 [shape = 'u32[]', space=smem, size = 0x4, offset = 0x4, fixed_abs, tag = 'smem constant byte address 0x4 - core index']
  #allocation1 [shape = 'u32[144,128]{1,0:T(1,128)}', space=vmem, size = 0x12000, scoped, tag = 'internal scratch']
  #allocation2 [shape = 'f32[64,512]{1,0:T(8,128)}', space=vmem, size = 0x20000, scoped, tag = 'scratch operand']
  %s0 = inlined_call_operand.vmem [shape: f32[64,32], index: 0, kind: input, shape index: {}]
  %s1 = inlined_call_operand.hbm [shape: f32[32,512], index: 1, kind: input, shape index: {}]
  %s2 = inlined_call_operand.hbm [shape: f32[128,512], index: 2, kind: input, shape index: {}]
  %s3 = inlined_call_operand.vmem [shape: f32[1,512], index: 3, kind: input, shape index: {}]
  %s4 = inlined_call_operand.hbm [shape: f32[8,128], index: 4, kind: output, shape index: {}]
  %s5 = sld [smem:[#allocation0]]
  $region34: #{tpu_custom_call.1} parent=0
    _
  %s7 = ssub.s32 1, %s5
  %s8 = scalar_select 0, %s7, %s5
  $region1: #{tpu_custom_call.1} parent=0
    #allocation3 [shape = 'u8[65536]{0}', space=vmem, size = 0x10000, scoped, tag = 'input window, operand 1, single buffered']
    #allocation4 [shape = 's32[1]{0}', space=sflag, size = 0x4, scoped, tag = 'scoped memory for tpu_custom_call.1']
    #allocation5 [shape = 's32[1]{0}', space=sflag, size = 0x4, scoped, tag = 'scoped memory for tpu_custom_call.1']
    #allocation6 [shape = 'u8[262144]{0}', space=vmem, size = 0x40000, scoped, tag = 'input window, operand 2, single buffered']
    #allocation7 [shape = 's32[1]{0}', space=sflag, size = 0x4, scoped, tag = 'scoped memory for tpu_custom_call.1']
    #allocation8 [shape = 'u8[4096]{0}', space=vmem, size = 0x1000, scoped, tag = 'output window, operand 0, single buffered']
    %9 = vsyncpa [#allocation4], 0
    %10 = vsyncpa [#allocation7], 0
    %11 = vsyncpa [#allocation5], 0
    // Predicated region
    $region2: #{tpu_custom_call.1} parent=1 // pred_check
      _
    $region3: #{tpu_custom_call.1} parent=1 // pred_check_branch
      %13 = sbr.rel (0) target = $region5
    $region4: #{tpu_custom_call.1} parent=1 // pred_region
      _
    $region5: #{tpu_custom_call.1} parent=1 // pred_fallthru
      _
    // Predicated region
    $region6: #{tpu_custom_call.1} parent=1 // pred_check
      _
    $region7: #{tpu_custom_call.1} parent=1 // pred_check_branch
      %15 = sbr.rel (0) target = $region9
    $region8: #{tpu_custom_call.1} parent=1 // pred_region
      %s17 = ssub.s32 2048, 2048
      %18 = vsyncadd [#allocation4], %s17
      %s19 = sshll.u32 [#allocation3], 4
      %s20 = int_to_ptr.vmem [resolvable:$true] %s19
      %25 = dma.hbm_to_vmem [thread:$0]  %s1, 2048, %s20, [#allocation4], 512, 512, 32
    $region9: #{tpu_custom_call.1} parent=1 // pred_fallthru
      _
    // Predicated region
    $region10: #{tpu_custom_call.1} parent=1 // pred_check
      _
    $region11: #{tpu_custom_call.1} parent=1 // pred_check_branch
      %27 = sbr.rel (0) target = $region13
    $region12: #{tpu_custom_call.1} parent=1 // pred_region
      %s29 = ssub.s32 8192, 8192
      %30 = vsyncadd [#allocation7], %s29
      %s31 = sshll.u32 [#allocation6], 4
      %s32 = int_to_ptr.vmem [resolvable:$true] %s31
      %37 = dma.hbm_to_vmem [thread:$0]  %s2, 8192, %s32, [#allocation7], 512, 512, 32
    $region13: #{tpu_custom_call.1} parent=1 // pred_fallthru
      _
    // Predicated region
    $region14: #{tpu_custom_call.1} parent=1 // pred_check
      _
    $region15: #{tpu_custom_call.1} parent=1 // pred_check_branch
      %39 = sbr.rel (0) target = $region17
    $region16: #{tpu_custom_call.1} parent=1 // pred_region
      _
    $region17: #{tpu_custom_call.1} parent=1 // pred_fallthru
      _
    // Predicated region
    $region18: #{tpu_custom_call.1} parent=1 // pred_check
      _
    $region19: #{tpu_custom_call.1} parent=1 // pred_check_branch
      %41 = sbr.rel (0) target = $region21
    $region20: #{tpu_custom_call.1} parent=1 // pred_region
      %42 = dma.done [#allocation4], 2048
    $region21: #{tpu_custom_call.1} parent=1 // pred_fallthru
      _
    // Predicated region
    $region22: #{tpu_custom_call.1} parent=1 // pred_check
      _
    $region23: #{tpu_custom_call.1} parent=1 // pred_check_branch
      %44 = sbr.rel (0) target = $region25
    $region24: #{tpu_custom_call.1} parent=1 // pred_region
      %45 = dma.done [#allocation7], 8192
    $region25: #{tpu_custom_call.1} parent=1 // pred_fallthru
      _
    %v46 = vld [vmem:[%s0] sm:$0xff]
    %v47 = vld [vmem:[%s0 + $0x8] sm:$0xff]
    %v48 = vld [vmem:[%s0 + $0x10] sm:$0xff]
    %v49 = vld [vmem:[%s0 + $0x18] sm:$0xff]
    %v50 = vld [vmem:[%s0 + $0x20] sm:$0xff]
    %v51 = vld [vmem:[%s0 + $0x28] sm:$0xff]
    %v52 = vld [vmem:[%s0 + $0x30] sm:$0xff]
    %v53 = vld [vmem:[%s0 + $0x38] sm:$0xff]
    %v54 = vld [vmem:[#allocation3] sm:$0xff]
    %v55 = vld [vmem:[#allocation3 + $0x8] sm:$0xff]
    %v56 = vld [vmem:[#allocation3 + $0x10] sm:$0xff]
    %v57 = vld [vmem:[#allocation3 + $0x18] sm:$0xff]
    %v58 = vld [vmem:[#allocation3 + $0x20] sm:$0xff]
    %v59 = vld [vmem:[#allocation3 + $0x28] sm:$0xff]
    %v60 = vld [vmem:[#allocation3 + $0x30] sm:$0xff]
    %v61 = vld [vmem:[#allocation3 + $0x38] sm:$0xff]
    %v62 = vld [vmem:[#allocation3 + $0x40] sm:$0xff]
    %v63 = vld [vmem:[#allocation3 + $0x48] sm:$0xff]
    %v64 = vld [vmem:[#allocation3 + $0x50] sm:$0xff]
    %v65 = vld [vmem:[#allocation3 + $0x58] sm:$0xff]
    %v66 = vld [vmem:[#allocation3 + $0x60] sm:$0xff]
    %v67 = vld [vmem:[#allocation3 + $0x68] sm:$0xff]
    %v68 = vld [vmem:[#allocation3 + $0x70] sm:$0xff]
    %v69 = vld [vmem:[#allocation3 + $0x78] sm:$0xff]
    %v70 = vld [vmem:[%s3] sm:$0xf]
    %v72 = vlaneseq
    %v73 = vshrl.u32 %v72, 7
    %v74 = vsub.s32 0, %v73
    %v75 = vrot.slane %v70, %v74
    %v76 = vlaneseq
    %v77 = vshrl.u32 %v76, 7
    %v78 = vsub.s32 1, %v77
    %v79 = vrot.slane %v70, %v78
    %v80 = vlaneseq
    %v81 = vshrl.u32 %v80, 7
    %v82 = vsub.s32 2, %v81
    %v83 = vrot.slane %v70, %v82
    %v84 = vlaneseq
    %v85 = vshrl.u32 %v84, 7
    %v86 = vsub.s32 3, %v85
    %v87 = vrot.slane %v70, %v86
    %vm92 = vcmask 261120
    %v94 = vsel %vm92, %v46, 0
    %v97 = vsel %vm92, %v47, 0
    %v100 = vsel %vm92, %v48, 0
    %v103 = vsel %vm92, %v49, 0
    %v106 = vsel %vm92, %v50, 0
    %v109 = vsel %vm92, %v51, 0
    %v112 = vsel %vm92, %v52, 0
    %v115 = vsel %vm92, %v53, 0
    %117 = vmatprep.subr.mxu0 0.0
    %118 = vmatpush1.msra.mxu0 0.0
    %119 = vmatprep.subr.mxu0 0.0
    %120 = vmatpush1.msra.mxu0 0.0
    %121 = vmatprep.subr.mxu0 0.0
    %122 = vmatpush1.msra.mxu0 0.0
    %123 = vmatprep.subr.mxu0 0.0
    %124 = vmatpush1.msra.mxu0 0.0
    %125 = vmatprep.subr.mxu0 0.0
    %126 = vmatpush1.msra.mxu0 0.0
    %127 = vmatprep.subr.mxu0 0.0
    %128 = vmatpush1.msra.mxu0 0.0
    %129 = vmatprep.subr.mxu0 0.0
    %130 = vmatpush1.msra.mxu0 0.0
    %131 = vmatprep.subr.mxu0 0.0
    %132 = vmatpush1.msra.mxu0 0.0
    %133 = vmatprep.subr.mxu0 0.0
    %134 = vmatpush1.msra.mxu0 0.0
    %135 = vmatprep.subr.mxu0 0.0
    %136 = vmatpush1.msra.mxu0 0.0
    %137 = vmatprep.subr.mxu0 0.0
    %138 = vmatpush1.msra.mxu0 0.0
    %139 = vmatprep.subr.mxu0 0.0
    %140 = vmatpush1.msra.mxu0 0.0
    %141 = vmatprep.subr.mxu0 %v67
    %142 = vmatpush1.msra.mxu0 %v66
    %143 = vmatprep.subr.mxu0 %v63
    %144 = vmatpush1.msra.mxu0 %v62
    %145 = vmatprep.subr.mxu0 %v59
    %146 = vmatpush1.msra.mxu0 %v58
    %147 = vmatprep.subr.mxu0 %v55
    %148 = vmatpush1.msra.mxu0 %v54
    %149 = vmatprep.subr.mxu0 0.0
    %150 = vmatpush2.msra.mxu0 0.0
    %151 = vmatprep.subr.mxu0 0.0
    %152 = vmatpush2.msra.mxu0 0.0
    %153 = vmatprep.subr.mxu0 0.0
    %154 = vmatpush2.msra.mxu0 0.0
    %155 = vmatprep.subr.mxu0 0.0
    %156 = vmatpush2.msra.mxu0 0.0
    %157 = vmatprep.subr.mxu0 0.0
    %158 = vmatpush2.msra.mxu0 0.0
    %159 = vmatprep.subr.mxu0 0.0
    %160 = vmatpush2.msra.mxu0 0.0
    %161 = vmatprep.subr.mxu0 0.0
    %162 = vmatpush2.msra.mxu0 0.0
    %163 = vmatprep.subr.mxu0 0.0
    %164 = vmatpush2.msra.mxu0 0.0
    %165 = vmatprep.subr.mxu0 0.0
    %166 = vmatpush2.msra.mxu0 0.0
    %167 = vmatprep.subr.mxu0 0.0
    %168 = vmatpush2.msra.mxu0 0.0
    %169 = vmatprep.subr.mxu0 0.0
    %170 = vmatpush2.msra.mxu0 0.0
    %171 = vmatprep.subr.mxu0 0.0
    %172 = vmatpush2.msra.mxu0 0.0
    %173 = vmatprep.subr.mxu0 0.0
    %174 = vmatpush2.msra.mxu0 0.0
    %175 = vmatprep.subr.mxu0 0.0
    %176 = vmatpush2.msra.mxu0 0.0
    %177 = vmatprep.subr.mxu0 0.0
    %178 = vmatpush2.msra.mxu0 0.0
    %179 = vmatprep.subr.mxu0 0.0
    %180 = vmatpush2.msra.mxu0 0.0
    %181 = vmatprep.mubr.f32.mxu0 0.0
    %182 = vmatmul.mubr.f32.gmra.mxu0 %v94
    %v183 = vpop.f32.mrf.mxu0
    %v184 = vadd.f32 %v75, %v183
    %v185 = vpop.f32.mrf.mxu0
    %v186 = vadd.f32 %v79, %v185
    %187 = vmatprep.mubr.f32.mxu0 0.0
    %188 = vmatmul.mubr.f32.gmra.mxu0 %v97
    %v189 = vpop.f32.mrf.mxu0
    %v190 = vadd.f32 %v75, %v189
    %v191 = vpop.f32.mrf.mxu0
    %v192 = vadd.f32 %v79, %v191
    %193 = vmatprep.mubr.f32.mxu0 0.0
    %194 = vmatmul.mubr.f32.gmra.mxu0 %v100
    %v195 = vpop.f32.mrf.mxu0
    %v196 = vadd.f32 %v75, %v195
    %v197 = vpop.f32.mrf.mxu0
    %v198 = vadd.f32 %v79, %v197
    %199 = vmatprep.mubr.f32.mxu0 0.0
    %200 = vmatmul.mubr.f32.gmra.mxu0 %v103
    %v201 = vpop.f32.mrf.mxu0
    %v202 = vadd.f32 %v75, %v201
    %v203 = vpop.f32.mrf.mxu0
    %v204 = vadd.f32 %v79, %v203
    %205 = vmatprep.mubr.f32.mxu0 0.0
    %206 = vmatmul.mubr.f32.gmra.mxu0 %v106
    %v207 = vpop.f32.mrf.mxu0
    %v208 = vadd.f32 %v75, %v207
    %v209 = vpop.f32.mrf.mxu0
    %v210 = vadd.f32 %v79, %v209
    %211 = vmatprep.mubr.f32.mxu0 0.0
    %212 = vmatmul.mubr.f32.gmra.mxu0 %v109
    %v213 = vpop.f32.mrf.mxu0
    %v214 = vadd.f32 %v75, %v213
    %v215 = vpop.f32.mrf.mxu0
    %v216 = vadd.f32 %v79, %v215
    %217 = vmatprep.mubr.f32.mxu0 0.0
    %218 = vmatmul.mubr.f32.gmra.mxu0 %v112
    %v219 = vpop.f32.mrf.mxu0
    %v220 = vadd.f32 %v75, %v219
    %v221 = vpop.f32.mrf.mxu0
    %v222 = vadd.f32 %v79, %v221
    %223 = vmatprep.mubr.f32.mxu0 0.0
    %224 = vmatmul.mubr.f32.gmra.mxu0 %v115
    %v225 = vpop.f32.mrf.mxu0
    %v226 = vadd.f32 %v75, %v225
    %v227 = vpop.f32.mrf.mxu0
    %v228 = vadd.f32 %v79, %v227
    %229 = vdwg.mxu0
    %230 = vmatprep.subr.mxu0 0.0
    %231 = vmatpush1.msra.mxu0 0.0
    %232 = vmatprep.subr.mxu0 0.0
    %233 = vmatpush1.msra.mxu0 0.0
    %234 = vmatprep.subr.mxu0 0.0
    %235 = vmatpush1.msra.mxu0 0.0
    %236 = vmatprep.subr.mxu0 0.0
    %237 = vmatpush1.msra.mxu0 0.0
    %238 = vmatprep.subr.mxu0 0.0
    %239 = vmatpush1.msra.mxu0 0.0
    %240 = vmatprep.subr.mxu0 0.0
    %241 = vmatpush1.msra.mxu0 0.0
    %242 = vmatprep.subr.mxu0 0.0
    %243 = vmatpush1.msra.mxu0 0.0
    %244 = vmatprep.subr.mxu0 0.0
    %245 = vmatpush1.msra.mxu0 0.0
    %246 = vmatprep.subr.mxu0 0.0
    %247 = vmatpush1.msra.mxu0 0.0
    %248 = vmatprep.subr.mxu0 0.0
    %249 = vmatpush1.msra.mxu0 0.0
    %250 = vmatprep.subr.mxu0 0.0
    %251 = vmatpush1.msra.mxu0 0.0
    %252 = vmatprep.subr.mxu0 0.0
    %253 = vmatpush1.msra.mxu0 0.0
    %254 = vmatprep.subr.mxu0 %v69
    %255 = vmatpush1.msra.mxu0 %v68
    %256 = vmatprep.subr.mxu0 %v65
    %257 = vmatpush1.msra.mxu0 %v64
    %258 = vmatprep.subr.mxu0 %v61
    %259 = vmatpush1.msra.mxu0 %v60
    %260 = vmatprep.subr.mxu0 %v57
    %261 = vmatpush1.msra.mxu0 %v56
    %262 = vmatprep.subr.mxu0 0.0
    %263 = vmatpush2.msra.mxu0 0.0
    %264 = vmatprep.subr.mxu0 0.0
    %265 = vmatpush2.msra.mxu0 0.0
    %266 = vmatprep.subr.mxu0 0.0
    %267 = vmatpush2.msra.mxu0 0.0
    %268 = vmatprep.subr.mxu0 0.0
    %269 = vmatpush2.msra.mxu0 0.0
    %270 = vmatprep.subr.mxu0 0.0
    %271 = vmatpush2.msra.mxu0 0.0
    %272 = vmatprep.subr.mxu0 0.0
    %273 = vmatpush2.msra.mxu0 0.0
    %274 = vmatprep.subr.mxu0 0.0
    %275 = vmatpush2.msra.mxu0 0.0
    %276 = vmatprep.subr.mxu0 0.0
    %277 = vmatpush2.msra.mxu0 0.0
    %278 = vmatprep.subr.mxu0 0.0
    %279 = vmatpush2.msra.mxu0 0.0
    %280 = vmatprep.subr.mxu0 0.0
    %281 = vmatpush2.msra.mxu0 0.0
    %282 = vmatprep.subr.mxu0 0.0
    %283 = vmatpush2.msra.mxu0 0.0
    %284 = vmatprep.subr.mxu0 0.0
    %285 = vmatpush2.msra.mxu0 0.0
    %286 = vmatprep.subr.mxu0 0.0
    %287 = vmatpush2.msra.mxu0 0.0
    %288 = vmatprep.subr.mxu0 0.0
    %289 = vmatpush2.msra.mxu0 0.0
    %290 = vmatprep.subr.mxu0 0.0
    %291 = vmatpush2.msra.mxu0 0.0
    %292 = vmatprep.subr.mxu0 0.0
    %293 = vmatpush2.msra.mxu0 0.0
    %294 = vmatprep.mubr.f32.mxu0 0.0
    %295 = vmatmul.mubr.f32.gmra.mxu0 %v94
    %v296 = vpop.f32.mrf.mxu0
    %v297 = vadd.f32 %v83, %v296
    %v298 = vpop.f32.mrf.mxu0
    %v299 = vadd.f32 %v87, %v298
    %300 = vmatprep.mubr.f32.mxu0 0.0
    %301 = vmatmul.mubr.f32.gmra.mxu0 %v97
    %v302 = vpop.f32.mrf.mxu0
    %v303 = vadd.f32 %v83, %v302
    %v304 = vpop.f32.mrf.mxu0
    %v305 = vadd.f32 %v87, %v304
    %306 = vmatprep.mubr.f32.mxu0 0.0
    %307 = vmatmul.mubr.f32.gmra.mxu0 %v100
    %v308 = vpop.f32.mrf.mxu0
    %v309 = vadd.f32 %v83, %v308
    %v310 = vpop.f32.mrf.mxu0
    %v311 = vadd.f32 %v87, %v310
    %312 = vmatprep.mubr.f32.mxu0 0.0
    %313 = vmatmul.mubr.f32.gmra.mxu0 %v103
    %v314 = vpop.f32.mrf.mxu0
    %v315 = vadd.f32 %v83, %v314
    %v316 = vpop.f32.mrf.mxu0
    %v317 = vadd.f32 %v87, %v316
    %318 = vmatprep.mubr.f32.mxu0 0.0
    %319 = vmatmul.mubr.f32.gmra.mxu0 %v106
    %v320 = vpop.f32.mrf.mxu0
    %v321 = vadd.f32 %v83, %v320
    %v322 = vpop.f32.mrf.mxu0
    %v323 = vadd.f32 %v87, %v322
    %324 = vmatprep.mubr.f32.mxu0 0.0
    %325 = vmatmul.mubr.f32.gmra.mxu0 %v109
    %v326 = vpop.f32.mrf.mxu0
    %v327 = vadd.f32 %v83, %v326
    %v328 = vpop.f32.mrf.mxu0
    %v329 = vadd.f32 %v87, %v328
    %330 = vmatprep.mubr.f32.mxu0 0.0
    %331 = vmatmul.mubr.f32.gmra.mxu0 %v112
    %v332 = vpop.f32.mrf.mxu0
    %v333 = vadd.f32 %v83, %v332
    %v334 = vpop.f32.mrf.mxu0
    %v335 = vadd.f32 %v87, %v334
    %336 = vmatprep.mubr.f32.mxu0 0.0
    %337 = vmatmul.mubr.f32.gmra.mxu0 %v115
    %v338 = vpop.f32.mrf.mxu0
    %v339 = vadd.f32 %v83, %v338
    %v340 = vpop.f32.mrf.mxu0
    %v341 = vadd.f32 %v87, %v340
    %342 = vdwg.mxu0
    %343 = vst [vmem:[#allocation2] sm:$0xff] %v184
    %344 = vst [vmem:[#allocation2 + $0x8] sm:$0xff] %v186
    %345 = vst [vmem:[#allocation2 + $0x10] sm:$0xff] %v297
    %346 = vst [vmem:[#allocation2 + $0x18] sm:$0xff] %v299
    %347 = vst [vmem:[#allocation2 + $0x20] sm:$0xff] %v190
    %348 = vst [vmem:[#allocation2 + $0x28] sm:$0xff] %v192
    %349 = vst [vmem:[#allocation2 + $0x30] sm:$0xff] %v303
    %350 = vst [vmem:[#allocation2 + $0x38] sm:$0xff] %v305
    %351 = vst [vmem:[#allocation2 + $0x40] sm:$0xff] %v196
    %352 = vst [vmem:[#allocation2 + $0x48] sm:$0xff] %v198
    %353 = vst [vmem:[#allocation2 + $0x50] sm:$0xff] %v309
    %354 = vst [vmem:[#allocation2 + $0x58] sm:$0xff] %v311
    %355 = vst [vmem:[#allocation2 + $0x60] sm:$0xff] %v202
    %356 = vst [vmem:[#allocation2 + $0x68] sm:$0xff] %v204
    %357 = vst [vmem:[#allocation2 + $0x70] sm:$0xff] %v315
    %358 = vst [vmem:[#allocation2 + $0x78] sm:$0xff] %v317
    %359 = vst [vmem:[#allocation2 + $0x80] sm:$0xff] %v208
    %360 = vst [vmem:[#allocation2 + $0x88] sm:$0xff] %v210
    %361 = vst [vmem:[#allocation2 + $0x90] sm:$0xff] %v321
    %362 = vst [vmem:[#allocation2 + $0x98] sm:$0xff] %v323
    %363 = vst [vmem:[#allocation2 + $0xa0] sm:$0xff] %v214
    %364 = vst [vmem:[#allocation2 + $0xa8] sm:$0xff] %v216
    %365 = vst [vmem:[#allocation2 + $0xb0] sm:$0xff] %v327
    %366 = vst [vmem:[#allocation2 + $0xb8] sm:$0xff] %v329
    %367 = vst [vmem:[#allocation2 + $0xc0] sm:$0xff] %v220
    %368 = vst [vmem:[#allocation2 + $0xc8] sm:$0xff] %v222
    %369 = vst [vmem:[#allocation2 + $0xd0] sm:$0xff] %v333
    %370 = vst [vmem:[#allocation2 + $0xd8] sm:$0xff] %v335
    %371 = vst [vmem:[#allocation2 + $0xe0] sm:$0xff] %v226
    %372 = vst [vmem:[#allocation2 + $0xe8] sm:$0xff] %v228
    %373 = vst [vmem:[#allocation2 + $0xf0] sm:$0xff] %v339
    %374 = vst [vmem:[#allocation2 + $0xf8] sm:$0xff] %v341
    %v375 = vld [vmem:[#allocation6] sm:$0xff]
    %v376 = vld [vmem:[#allocation6 + $0x8] sm:$0xff]
    %v377 = vld [vmem:[#allocation6 + $0x10] sm:$0xff]
    %v378 = vld [vmem:[#allocation6 + $0x18] sm:$0xff]
    %v379 = vld [vmem:[#allocation6 + $0x20] sm:$0xff]
    %v380 = vld [vmem:[#allocation6 + $0x28] sm:$0xff]
    %v381 = vld [vmem:[#allocation6 + $0x30] sm:$0xff]
    %v382 = vld [vmem:[#allocation6 + $0x38] sm:$0xff]
    %v383 = vld [vmem:[#allocation6 + $0x40] sm:$0xff]
    %v384 = vld [vmem:[#allocation6 + $0x48] sm:$0xff]
    %v385 = vld [vmem:[#allocation6 + $0x50] sm:$0xff]
    %v386 = vld [vmem:[#allocation6 + $0x58] sm:$0xff]
    %v387 = vld [vmem:[#allocation6 + $0x60] sm:$0xff]
    %v388 = vld [vmem:[#allocation6 + $0x68] sm:$0xff]
    %v389 = vld [vmem:[#allocation6 + $0x70] sm:$0xff]
    %v390 = vld [vmem:[#allocation6 + $0x78] sm:$0xff]
    %v391 = vld [vmem:[#allocation6 + $0x80] sm:$0xff]
    %v392 = vld [vmem:[#allocation6 + $0x88] sm:$0xff]
    %v393 = vld [vmem:[#allocation6 + $0x90] sm:$0xff]
    %v394 = vld [vmem:[#allocation6 + $0x98] sm:$0xff]
    %v395 = vld [vmem:[#allocation6 + $0xa0] sm:$0xff]
    %v396 = vld [vmem:[#allocation6 + $0xa8] sm:$0xff]
    %v397 = vld [vmem:[#allocation6 + $0xb0] sm:$0xff]
    %v398 = vld [vmem:[#allocation6 + $0xb8] sm:$0xff]
    %v399 = vld [vmem:[#allocation6 + $0xc0] sm:$0xff]
    %v400 = vld [vmem:[#allocation6 + $0xc8] sm:$0xff]
    %v401 = vld [vmem:[#allocation6 + $0xd0] sm:$0xff]
    %v402 = vld [vmem:[#allocation6 + $0xd8] sm:$0xff]
    %v403 = vld [vmem:[#allocation6 + $0xe0] sm:$0xff]
    %v404 = vld [vmem:[#allocation6 + $0xe8] sm:$0xff]
    %v405 = vld [vmem:[#allocation6 + $0xf0] sm:$0xff]
    %v406 = vld [vmem:[#allocation6 + $0xf8] sm:$0xff]
    %v407 = vld [vmem:[#allocation6 + $0x100] sm:$0xff]
    %v408 = vld [vmem:[#allocation6 + $0x108] sm:$0xff]
    %v409 = vld [vmem:[#allocation6 + $0x110] sm:$0xff]
    %v410 = vld [vmem:[#allocation6 + $0x118] sm:$0xff]
    %v411 = vld [vmem:[#allocation6 + $0x120] sm:$0xff]
    %v412 = vld [vmem:[#allocation6 + $0x128] sm:$0xff]
    %v413 = vld [vmem:[#allocation6 + $0x130] sm:$0xff]
    %v414 = vld [vmem:[#allocation6 + $0x138] sm:$0xff]
    %v415 = vld [vmem:[#allocation6 + $0x140] sm:$0xff]
    %v416 = vld [vmem:[#allocation6 + $0x148] sm:$0xff]
    %v417 = vld [vmem:[#allocation6 + $0x150] sm:$0xff]
    %v418 = vld [vmem:[#allocation6 + $0x158] sm:$0xff]
    %v419 = vld [vmem:[#allocation6 + $0x160] sm:$0xff]
    %v420 = vld [vmem:[#allocation6 + $0x168] sm:$0xff]
    %v421 = vld [vmem:[#allocation6 + $0x170] sm:$0xff]
    %v422 = vld [vmem:[#allocation6 + $0x178] sm:$0xff]
    %v423 = vld [vmem:[#allocation6 + $0x180] sm:$0xff]
    %v424 = vld [vmem:[#allocation6 + $0x188] sm:$0xff]
    %v425 = vld [vmem:[#allocation6 + $0x190] sm:$0xff]
    %v426 = vld [vmem:[#allocation6 + $0x198] sm:$0xff]
    %v427 = vld [vmem:[#allocation6 + $0x1a0] sm:$0xff]
    %v428 = vld [vmem:[#allocation6 + $0x1a8] sm:$0xff]
    %v429 = vld [vmem:[#allocation6 + $0x1b0] sm:$0xff]
    %v430 = vld [vmem:[#allocation6 + $0x1b8] sm:$0xff]
    %v431 = vld [vmem:[#allocation6 + $0x1c0] sm:$0xff]
    %v432 = vld [vmem:[#allocation6 + $0x1c8] sm:$0xff]
    %v433 = vld [vmem:[#allocation6 + $0x1d0] sm:$0xff]
    %v434 = vld [vmem:[#allocation6 + $0x1d8] sm:$0xff]
    %v435 = vld [vmem:[#allocation6 + $0x1e0] sm:$0xff]
    %v436 = vld [vmem:[#allocation6 + $0x1e8] sm:$0xff]
    %v437 = vld [vmem:[#allocation6 + $0x1f0] sm:$0xff]
    %v438 = vld [vmem:[#allocation6 + $0x1f8] sm:$0xff]
    %s439 = smul.u32 0, 4
    %s440 = smul.addr %s439, 8
    %s441 = scalar_lea.vmem [#allocation2], %s440
    %v442 = vld [vmem:[%s441] sm:$0xff]
    %v443 = vld [vmem:[%s441 + $0x8] sm:$0xff]
    %v444 = vld [vmem:[%s441 + $0x10] sm:$0xff]
    %v445 = vld [vmem:[%s441 + $0x18] sm:$0xff]
    %446 = vmatprep.subr.mxu0 %v436
    %447 = vmatpush1.msra.mxu0 %v435
    %448 = vmatprep.subr.mxu0 %v432
    %449 = vmatpush1.msra.mxu0 %v431
    %450 = vmatprep.subr.mxu0 %v428
    %451 = vmatpush1.msra.mxu0 %v427
    %452 = vmatprep.subr.mxu0 %v424
    %453 = vmatpush1.msra.mxu0 %v423
    %454 = vmatprep.subr.mxu0 %v420
    %455 = vmatpush1.msra.mxu0 %v419
    %456 = vmatprep.subr.mxu0 %v416
    %457 = vmatpush1.msra.mxu0 %v415
    %458 = vmatprep.subr.mxu0 %v412
    %459 = vmatpush1.msra.mxu0 %v411
    %460 = vmatprep.subr.mxu0 %v408
    %461 = vmatpush1.msra.mxu0 %v407
    %462 = vmatprep.subr.mxu0 %v404
    %463 = vmatpush1.msra.mxu0 %v403
    %464 = vmatprep.subr.mxu0 %v400
    %465 = vmatpush1.msra.mxu0 %v399
    %466 = vmatprep.subr.mxu0 %v396
    %467 = vmatpush1.msra.mxu0 %v395
    %468 = vmatprep.subr.mxu0 %v392
    %469 = vmatpush1.msra.mxu0 %v391
    %470 = vmatprep.subr.mxu0 %v388
    %471 = vmatpush1.msra.mxu0 %v387
    %472 = vmatprep.subr.mxu0 %v384
    %473 = vmatpush1.msra.mxu0 %v383
    %474 = vmatprep.subr.mxu0 %v380
    %475 = vmatpush1.msra.mxu0 %v379
    %476 = vmatprep.subr.mxu0 %v376
    %477 = vmatpush1.msra.mxu0 %v375
    %478 = vmatprep.subr.mxu0 0.0
    %479 = vmatpush2.msra.mxu0 0.0
    %480 = vmatprep.subr.mxu0 0.0
    %481 = vmatpush2.msra.mxu0 0.0
    %482 = vmatprep.subr.mxu0 0.0
    %483 = vmatpush2.msra.mxu0 0.0
    %484 = vmatprep.subr.mxu0 0.0
    %485 = vmatpush2.msra.mxu0 0.0
    %486 = vmatprep.subr.mxu0 0.0
    %487 = vmatpush2.msra.mxu0 0.0
    %488 = vmatprep.subr.mxu0 0.0
    %489 = vmatpush2.msra.mxu0 0.0
    %490 = vmatprep.subr.mxu0 0.0
    %491 = vmatpush2.msra.mxu0 0.0
    %492 = vmatprep.subr.mxu0 0.0
    %493 = vmatpush2.msra.mxu0 0.0
    %494 = vmatprep.subr.mxu0 0.0
    %495 = vmatpush2.msra.mxu0 0.0
    %496 = vmatprep.subr.mxu0 0.0
    %497 = vmatpush2.msra.mxu0 0.0
    %498 = vmatprep.subr.mxu0 0.0
    %499 = vmatpush2.msra.mxu0 0.0
    %500 = vmatprep.subr.mxu0 0.0
    %501 = vmatpush2.msra.mxu0 0.0
    %502 = vmatprep.subr.mxu0 0.0
    %503 = vmatpush2.msra.mxu0 0.0
    %504 = vmatprep.subr.mxu0 0.0
    %505 = vmatpush2.msra.mxu0 0.0
    %506 = vmatprep.subr.mxu0 0.0
    %507 = vmatpush2.msra.mxu0 0.0
    %508 = vmatprep.subr.mxu0 0.0
    %509 = vmatpush2.msra.mxu0 0.0
    %510 = vmatprep.mubr.f32.mxu0 0.0
    %511 = vmatmul.mubr.f32.gmra.mxu0 0.0
    %v512 = vpop.f32.mrf.mxu0
    %v513 = vadd.f32 0.0, %v512
    %v514 = vpop.f32.mrf.mxu0
    %v515 = vadd.f32 0.0, %v514
    %516 = vdwg.mxu0
    %517 = vmatprep.subr.mxu0 %v438
    %518 = vmatpush1.msra.mxu0 %v437
    %519 = vmatprep.subr.mxu0 %v434
    %520 = vmatpush1.msra.mxu0 %v433
    %521 = vmatprep.subr.mxu0 %v430
    %522 = vmatpush1.msra.mxu0 %v429
    %523 = vmatprep.subr.mxu0 %v426
    %524 = vmatpush1.msra.mxu0 %v425
    %525 = vmatprep.subr.mxu0 %v422
    %526 = vmatpush1.msra.mxu0 %v421
    %527 = vmatprep.subr.mxu0 %v418
    %528 = vmatpush1.msra.mxu0 %v417
    %529 = vmatprep.subr.mxu0 %v414
    %530 = vmatpush1.msra.mxu0 %v413
    %531 = vmatprep.subr.mxu0 %v410
    %532 = vmatpush1.msra.mxu0 %v409
    %533 = vmatprep.subr.mxu0 %v406
    %534 = vmatpush1.msra.mxu0 %v405
    %535 = vmatprep.subr.mxu0 %v402
    %536 = vmatpush1.msra.mxu0 %v401
    %537 = vmatprep.subr.mxu0 %v398
    %538 = vmatpush1.msra.mxu0 %v397
    %539 = vmatprep.subr.mxu0 %v394
    %540 = vmatpush1.msra.mxu0 %v393
    %541 = vmatprep.subr.mxu0 %v390
    %542 = vmatpush1.msra.mxu0 %v389
    %543 = vmatprep.subr.mxu0 %v386
    %544 = vmatpush1.msra.mxu0 %v385
    %545 = vmatprep.subr.mxu0 %v382
    %546 = vmatpush1.msra.mxu0 %v381
    %547 = vmatprep.subr.mxu0 %v378
    %548 = vmatpush1.msra.mxu0 %v377
    %549 = vmatprep.subr.mxu0 0.0
    %550 = vmatpush2.msra.mxu0 0.0
    %551 = vmatprep.subr.mxu0 0.0
    %552 = vmatpush2.msra.mxu0 0.0
    %553 = vmatprep.subr.mxu0 0.0
    %554 = vmatpush2.msra.mxu0 0.0
    %555 = vmatprep.subr.mxu0 0.0
    %556 = vmatpush2.msra.mxu0 0.0
    %557 = vmatprep.subr.mxu0 0.0
    %558 = vmatpush2.msra.mxu0 0.0
    %559 = vmatprep.subr.mxu0 0.0
    %560 = vmatpush2.msra.mxu0 0.0
    %561 = vmatprep.subr.mxu0 0.0
    %562 = vmatpush2.msra.mxu0 0.0
    %563 = vmatprep.subr.mxu0 0.0
    %564 = vmatpush2.msra.mxu0 0.0
    %565 = vmatprep.subr.mxu0 0.0
    %566 = vmatpush2.msra.mxu0 0.0
    %567 = vmatprep.subr.mxu0 0.0
    %568 = vmatpush2.msra.mxu0 0.0
    %569 = vmatprep.subr.mxu0 0.0
    %570 = vmatpush2.msra.mxu0 0.0
    %571 = vmatprep.subr.mxu0 0.0
    %572 = vmatpush2.msra.mxu0 0.0
    %573 = vmatprep.subr.mxu0 0.0
    %574 = vmatpush2.msra.mxu0 0.0
    %575 = vmatprep.subr.mxu0 0.0
    %576 = vmatpush2.msra.mxu0 0.0
    %577 = vmatprep.subr.mxu0 0.0
    %578 = vmatpush2.msra.mxu0 0.0
    %579 = vmatprep.subr.mxu0 0.0
    %580 = vmatpush2.msra.mxu0 0.0
    %581 = vmatprep.mubr.f32.mxu0 0.0
    %582 = vmatmul.mubr.f32.gmra.mxu0 0.0
    %v583 = vpop.f32.mrf.mxu0
    %v584 = vadd.f32 0.0, %v583
    %v585 = vpop.f32.mrf.mxu0
    %v586 = vadd.f32 0.0, %v585
    %587 = vdwg.mxu0
    %v588 = vadd.f32 %v442, %v513
    %v589 = vadd.f32 %v443, %v515
    %v590 = vadd.f32 %v444, %v584
    %v591 = vadd.f32 %v445, %v586
    %v592 = vxor.u32 %v588, 2147483648
    %v593 = vmul.f32 %v592, 1.442695
    %v594 = vpow.pop %v593
    %v595 = vadd.f32 %v594, 1.0
    %v596 = vrcp.pop %v595
    %v597 = vmul.f32 1.0, %v596
    %v598 = vxor.u32 %v589, 2147483648
    %v599 = vmul.f32 %v598, 1.442695
    %v600 = vpow.pop %v599
    %v601 = vadd.f32 %v600, 1.0
    %v602 = vrcp.pop %v601
    %v603 = vmul.f32 1.0, %v602
    %v604 = vtanh.pop %v590
    %v605 = vxor.u32 %v591, 2147483648
    %v606 = vmul.f32 %v605, 1.442695
    %v607 = vpow.pop %v606
    %v608 = vadd.f32 %v607, 1.0
    %v609 = vrcp.pop %v608
    %v610 = vmul.f32 1.0, %v609
    %v611 = vmul.f32 %v603, 0.0
    %v612 = vmul.f32 %v597, %v604
    %v613 = vadd.f32 %v611, %v612
    %v614 = vtanh.pop %v613
    %v615 = vmul.f32 %v610, %v614
    %s616 = smul.u32 1, 4
    %s617 = smul.addr %s616, 8
    %s618 = scalar_lea.vmem [#allocation2], %s617
    %v619 = vld [vmem:[%s618] sm:$0xff]
    %v620 = vld [vmem:[%s618 + $0x8] sm:$0xff]
    %v621 = vld [vmem:[%s618 + $0x10] sm:$0xff]
    %v622 = vld [vmem:[%s618 + $0x18] sm:$0xff]
    %623 = vmatprep.subr.mxu0 %v436
    %624 = vmatpush1.msra.mxu0 %v435
    %625 = vmatprep.subr.mxu0 %v432
    %626 = vmatpush1.msra.mxu0 %v431
    %627 = vmatprep.subr.mxu0 %v428
    %628 = vmatpush1.msra.mxu0 %v427
    %629 = vmatprep.subr.mxu0 %v424
    %630 = vmatpush1.msra.mxu0 %v423
    %631 = vmatprep.subr.mxu0 %v420
    %632 = vmatpush1.msra.mxu0 %v419
    %633 = vmatprep.subr.mxu0 %v416
    %634 = vmatpush1.msra.mxu0 %v415
    %635 = vmatprep.subr.mxu0 %v412
    %636 = vmatpush1.msra.mxu0 %v411
    %637 = vmatprep.subr.mxu0 %v408
    %638 = vmatpush1.msra.mxu0 %v407
    %639 = vmatprep.subr.mxu0 %v404
    %640 = vmatpush1.msra.mxu0 %v403
    %641 = vmatprep.subr.mxu0 %v400
    %642 = vmatpush1.msra.mxu0 %v399
    %643 = vmatprep.subr.mxu0 %v396
    %644 = vmatpush1.msra.mxu0 %v395
    %645 = vmatprep.subr.mxu0 %v392
    %646 = vmatpush1.msra.mxu0 %v391
    %647 = vmatprep.subr.mxu0 %v388
    %648 = vmatpush1.msra.mxu0 %v387
    %649 = vmatprep.subr.mxu0 %v384
    %650 = vmatpush1.msra.mxu0 %v383
    %651 = vmatprep.subr.mxu0 %v380
    %652 = vmatpush1.msra.mxu0 %v379
    %653 = vmatprep.subr.mxu0 %v376
    %654 = vmatpush1.msra.mxu0 %v375
    %655 = vmatprep.subr.mxu0 0.0
    %656 = vmatpush2.msra.mxu0 0.0
    %657 = vmatprep.subr.mxu0 0.0
    %658 = vmatpush2.msra.mxu0 0.0
    %659 = vmatprep.subr.mxu0 0.0
    %660 = vmatpush2.msra.mxu0 0.0
    %661 = vmatprep.subr.mxu0 0.0
    %662 = vmatpush2.msra.mxu0 0.0
    %663 = vmatprep.subr.mxu0 0.0
    %664 = vmatpush2.msra.mxu0 0.0
    %665 = vmatprep.subr.mxu0 0.0
    %666 = vmatpush2.msra.mxu0 0.0
    %667 = vmatprep.subr.mxu0 0.0
    %668 = vmatpush2.msra.mxu0 0.0
    %669 = vmatprep.subr.mxu0 0.0
    %670 = vmatpush2.msra.mxu0 0.0
    %671 = vmatprep.subr.mxu0 0.0
    %672 = vmatpush2.msra.mxu0 0.0
    %673 = vmatprep.subr.mxu0 0.0
    %674 = vmatpush2.msra.mxu0 0.0
    %675 = vmatprep.subr.mxu0 0.0
    %676 = vmatpush2.msra.mxu0 0.0
    %677 = vmatprep.subr.mxu0 0.0
    %678 = vmatpush2.msra.mxu0 0.0
    %679 = vmatprep.subr.mxu0 0.0
    %680 = vmatpush2.msra.mxu0 0.0
    %681 = vmatprep.subr.mxu0 0.0
    %682 = vmatpush2.msra.mxu0 0.0
    %683 = vmatprep.subr.mxu0 0.0
    %684 = vmatpush2.msra.mxu0 0.0
    %685 = vmatprep.subr.mxu0 0.0
    %686 = vmatpush2.msra.mxu0 0.0
    %687 = vmatprep.mubr.f32.mxu0 0.0
    %688 = vmatmul.mubr.f32.gmra.mxu0 %v615
    %v689 = vpop.f32.mrf.mxu0
    %v690 = vadd.f32 0.0, %v689
    %v691 = vpop.f32.mrf.mxu0
    %v692 = vadd.f32 0.0, %v691
    %693 = vdwg.mxu0
    %694 = vmatprep.subr.mxu0 %v438
    %695 = vmatpush1.msra.mxu0 %v437
    %696 = vmatprep.subr.mxu0 %v434
    %697 = vmatpush1.msra.mxu0 %v433
    %698 = vmatprep.subr.mxu0 %v430
    %699 = vmatpush1.msra.mxu0 %v429
    %700 = vmatprep.subr.mxu0 %v426
    %701 = vmatpush1.msra.mxu0 %v425
    %702 = vmatprep.subr.mxu0 %v422
    %703 = vmatpush1.msra.mxu0 %v421
    %704 = vmatprep.subr.mxu0 %v418
    %705 = vmatpush1.msra.mxu0 %v417
    %706 = vmatprep.subr.mxu0 %v414
    %707 = vmatpush1.msra.mxu0 %v413
    %708 = vmatprep.subr.mxu0 %v410
    %709 = vmatpush1.msra.mxu0 %v409
    %710 = vmatprep.subr.mxu0 %v406
    %711 = vmatpush1.msra.mxu0 %v405
    %712 = vmatprep.subr.mxu0 %v402
    %713 = vmatpush1.msra.mxu0 %v401
    %714 = vmatprep.subr.mxu0 %v398
    %715 = vmatpush1.msra.mxu0 %v397
    %716 = vmatprep.subr.mxu0 %v394
    %717 = vmatpush1.msra.mxu0 %v393
    %718 = vmatprep.subr.mxu0 %v390
    %719 = vmatpush1.msra.mxu0 %v389
    %720 = vmatprep.subr.mxu0 %v386
    %721 = vmatpush1.msra.mxu0 %v385
    %722 = vmatprep.subr.mxu0 %v382
    %723 = vmatpush1.msra.mxu0 %v381
    %724 = vmatprep.subr.mxu0 %v378
    %725 = vmatpush1.msra.mxu0 %v377
    %726 = vmatprep.subr.mxu0 0.0
    %727 = vmatpush2.msra.mxu0 0.0
    %728 = vmatprep.subr.mxu0 0.0
    %729 = vmatpush2.msra.mxu0 0.0
    %730 = vmatprep.subr.mxu0 0.0
    %731 = vmatpush2.msra.mxu0 0.0
    %732 = vmatprep.subr.mxu0 0.0
    %733 = vmatpush2.msra.mxu0 0.0
    %734 = vmatprep.subr.mxu0 0.0
    %735 = vmatpush2.msra.mxu0 0.0
    %736 = vmatprep.subr.mxu0 0.0
    %737 = vmatpush2.msra.mxu0 0.0
    %738 = vmatprep.subr.mxu0 0.0
    %739 = vmatpush2.msra.mxu0 0.0
    %740 = vmatprep.subr.mxu0 0.0
    %741 = vmatpush2.msra.mxu0 0.0
    %742 = vmatprep.subr.mxu0 0.0
    %743 = vmatpush2.msra.mxu0 0.0
    %744 = vmatprep.subr.mxu0 0.0
    %745 = vmatpush2.msra.mxu0 0.0
    %746 = vmatprep.subr.mxu0 0.0
    %747 = vmatpush2.msra.mxu0 0.0
    %748 = vmatprep.subr.mxu0 0.0
    %749 = vmatpush2.msra.mxu0 0.0
    %750 = vmatprep.subr.mxu0 0.0
    %751 = vmatpush2.msra.mxu0 0.0
    %752 = vmatprep.subr.mxu0 0.0
    %753 = vmatpush2.msra.mxu0 0.0
    %754 = vmatprep.subr.mxu0 0.0
    %755 = vmatpush2.msra.mxu0 0.0
    %756 = vmatprep.subr.mxu0 0.0
    %757 = vmatpush2.msra.mxu0 0.0
    %758 = vmatprep.mubr.f32.mxu0 0.0
    %759 = vmatmul.mubr.f32.gmra.mxu0 %v615
    %v760 = vpop.f32.mrf.mxu0
    %v761 = vadd.f32 0.0, %v760
    %v762 = vpop.f32.mrf.mxu0
    %v763 = vadd.f32 0.0, %v762
    %764 = vdwg.mxu0
    %v765 = vadd.f32 %v619, %v690
    %v766 = vadd.f32 %v620, %v692
    %v767 = vadd.f32 %v621, %v761
    %v768 = vadd.f32 %v622, %v763
    %v769 = vxor.u32 %v765, 2147483648
    %v770 = vmul.f32 %v769, 1.442695
    %v771 = vpow.pop %v770
    %v772 = vadd.f32 %v771, 1.0
    %v773 = vrcp.pop %v772
    %v774 = vmul.f32 1.0, %v773
    %v775 = vxor.u32 %v766, 2147483648
    %v776 = vmul.f32 %v775, 1.442695
    %v777 = vpow.pop %v776
    %v778 = vadd.f32 %v777, 1.0
    %v779 = vrcp.pop %v778
    %v780 = vmul.f32 1.0, %v779
    %v781 = vtanh.pop %v767
    %v782 = vxor.u32 %v768, 2147483648
    %v783 = vmul.f32 %v782, 1.442695
    %v784 = vpow.pop %v783
    %v785 = vadd.f32 %v784, 1.0
    %v786 = vrcp.pop %v785
    %v787 = vmul.f32 1.0, %v786
    %v788 = vmul.f32 %v780, %v613
    %v789 = vmul.f32 %v774, %v781
    %v790 = vadd.f32 %v788, %v789
    %v791 = vtanh.pop %v790
    %v792 = vmul.f32 %v787, %v791
    %s793 = smul.u32 2, 4
    %s794 = smul.addr %s793, 8
    %s795 = scalar_lea.vmem [#allocation2], %s794
    %v796 = vld [vmem:[%s795] sm:$0xff]
    %v797 = vld [vmem:[%s795 + $0x8] sm:$0xff]
    %v798 = vld [vmem:[%s795 + $0x10] sm:$0xff]
    %v799 = vld [vmem:[%s795 + $0x18] sm:$0xff]
    %800 = vmatprep.subr.mxu0 %v436
    %801 = vmatpush1.msra.mxu0 %v435
    %802 = vmatprep.subr.mxu0 %v432
    %803 = vmatpush1.msra.mxu0 %v431
    %804 = vmatprep.subr.mxu0 %v428
    %805 = vmatpush1.msra.mxu0 %v427
    %806 = vmatprep.subr.mxu0 %v424
    %807 = vmatpush1.msra.mxu0 %v423
    %808 = vmatprep.subr.mxu0 %v420
    %809 = vmatpush1.msra.mxu0 %v419
    %810 = vmatprep.subr.mxu0 %v416
    %811 = vmatpush1.msra.mxu0 %v415
    %812 = vmatprep.subr.mxu0 %v412
    %813 = vmatpush1.msra.mxu0 %v411
    %814 = vmatprep.subr.mxu0 %v408
    %815 = vmatpush1.msra.mxu0 %v407
    %816 = vmatprep.subr.mxu0 %v404
    %817 = vmatpush1.msra.mxu0 %v403
    %818 = vmatprep.subr.mxu0 %v400
    %819 = vmatpush1.msra.mxu0 %v399
    %820 = vmatprep.subr.mxu0 %v396
    %821 = vmatpush1.msra.mxu0 %v395
    %822 = vmatprep.subr.mxu0 %v392
    %823 = vmatpush1.msra.mxu0 %v391
    %824 = vmatprep.subr.mxu0 %v388
    %825 = vmatpush1.msra.mxu0 %v387
    %826 = vmatprep.subr.mxu0 %v384
    %827 = vmatpush1.msra.mxu0 %v383
    %828 = vmatprep.subr.mxu0 %v380
    %829 = vmatpush1.msra.mxu0 %v379
    %830 = vmatprep.subr.mxu0 %v376
    %831 = vmatpush1.msra.mxu0 %v375
    %832 = vmatprep.subr.mxu0 0.0
    %833 = vmatpush2.msra.mxu0 0.0
    %834 = vmatprep.subr.mxu0 0.0
    %835 = vmatpush2.msra.mxu0 0.0
    %836 = vmatprep.subr.mxu0 0.0
    %837 = vmatpush2.msra.mxu0 0.0
    %838 = vmatprep.subr.mxu0 0.0
    %839 = vmatpush2.msra.mxu0 0.0
    %840 = vmatprep.subr.mxu0 0.0
    %841 = vmatpush2.msra.mxu0 0.0
    %842 = vmatprep.subr.mxu0 0.0
    %843 = vmatpush2.msra.mxu0 0.0
    %844 = vmatprep.subr.mxu0 0.0
    %845 = vmatpush2.msra.mxu0 0.0
    %846 = vmatprep.subr.mxu0 0.0
    %847 = vmatpush2.msra.mxu0 0.0
    %848 = vmatprep.subr.mxu0 0.0
    %849 = vmatpush2.msra.mxu0 0.0
    %850 = vmatprep.subr.mxu0 0.0
    %851 = vmatpush2.msra.mxu0 0.0
    %852 = vmatprep.subr.mxu0 0.0
    %853 = vmatpush2.msra.mxu0 0.0
    %854 = vmatprep.subr.mxu0 0.0
    %855 = vmatpush2.msra.mxu0 0.0
    %856 = vmatprep.subr.mxu0 0.0
    %857 = vmatpush2.msra.mxu0 0.0
    %858 = vmatprep.subr.mxu0 0.0
    %859 = vmatpush2.msra.mxu0 0.0
    %860 = vmatprep.subr.mxu0 0.0
    %861 = vmatpush2.msra.mxu0 0.0
    %862 = vmatprep.subr.mxu0 0.0
    %863 = vmatpush2.msra.mxu0 0.0
    %864 = vmatprep.mubr.f32.mxu0 0.0
    %865 = vmatmul.mubr.f32.gmra.mxu0 %v792
    %v866 = vpop.f32.mrf.mxu0
    %v867 = vadd.f32 0.0, %v866
    %v868 = vpop.f32.mrf.mxu0
    %v869 = vadd.f32 0.0, %v868
    %870 = vdwg.mxu0
    %871 = vmatprep.subr.mxu0 %v438
    %872 = vmatpush1.msra.mxu0 %v437
    %873 = vmatprep.subr.mxu0 %v434
    %874 = vmatpush1.msra.mxu0 %v433
    %875 = vmatprep.subr.mxu0 %v430
    %876 = vmatpush1.msra.mxu0 %v429
    %877 = vmatprep.subr.mxu0 %v426
    %878 = vmatpush1.msra.mxu0 %v425
    %879 = vmatprep.subr.mxu0 %v422
    %880 = vmatpush1.msra.mxu0 %v421
    %881 = vmatprep.subr.mxu0 %v418
    %882 = vmatpush1.msra.mxu0 %v417
    %883 = vmatprep.subr.mxu0 %v414
    %884 = vmatpush1.msra.mxu0 %v413
    %885 = vmatprep.subr.mxu0 %v410
    %886 = vmatpush1.msra.mxu0 %v409
    %887 = vmatprep.subr.mxu0 %v406
    %888 = vmatpush1.msra.mxu0 %v405
    %889 = vmatprep.subr.mxu0 %v402
    %890 = vmatpush1.msra.mxu0 %v401
    %891 = vmatprep.subr.mxu0 %v398
    %892 = vmatpush1.msra.mxu0 %v397
    %893 = vmatprep.subr.mxu0 %v394
    %894 = vmatpush1.msra.mxu0 %v393
    %895 = vmatprep.subr.mxu0 %v390
    %896 = vmatpush1.msra.mxu0 %v389
    %897 = vmatprep.subr.mxu0 %v386
    %898 = vmatpush1.msra.mxu0 %v385
    %899 = vmatprep.subr.mxu0 %v382
    %900 = vmatpush1.msra.mxu0 %v381
    %901 = vmatprep.subr.mxu0 %v378
    %902 = vmatpush1.msra.mxu0 %v377
    %903 = vmatprep.subr.mxu0 0.0
    %904 = vmatpush2.msra.mxu0 0.0
    %905 = vmatprep.subr.mxu0 0.0
    %906 = vmatpush2.msra.mxu0 0.0
    %907 = vmatprep.subr.mxu0 0.0
    %908 = vmatpush2.msra.mxu0 0.0
    %909 = vmatprep.subr.mxu0 0.0
    %910 = vmatpush2.msra.mxu0 0.0
    %911 = vmatprep.subr.mxu0 0.0
    %912 = vmatpush2.msra.mxu0 0.0
    %913 = vmatprep.subr.mxu0 0.0
    %914 = vmatpush2.msra.mxu0 0.0
    %915 = vmatprep.subr.mxu0 0.0
    %916 = vmatpush2.msra.mxu0 0.0
    %917 = vmatprep.subr.mxu0 0.0
    %918 = vmatpush2.msra.mxu0 0.0
    %919 = vmatprep.subr.mxu0 0.0
    %920 = vmatpush2.msra.mxu0 0.0
    %921 = vmatprep.subr.mxu0 0.0
    %922 = vmatpush2.msra.mxu0 0.0
    %923 = vmatprep.subr.mxu0 0.0
    %924 = vmatpush2.msra.mxu0 0.0
    %925 = vmatprep.subr.mxu0 0.0
    %926 = vmatpush2.msra.mxu0 0.0
    %927 = vmatprep.subr.mxu0 0.0
    %928 = vmatpush2.msra.mxu0 0.0
    %929 = vmatprep.subr.mxu0 0.0
    %930 = vmatpush2.msra.mxu0 0.0
    %931 = vmatprep.subr.mxu0 0.0
    %932 = vmatpush2.msra.mxu0 0.0
    %933 = vmatprep.subr.mxu0 0.0
    %934 = vmatpush2.msra.mxu0 0.0
    %935 = vmatprep.mubr.f32.mxu0 0.0
    %936 = vmatmul.mubr.f32.gmra.mxu0 %v792
    %v937 = vpop.f32.mrf.mxu0
    %v938 = vadd.f32 0.0, %v937
    %v939 = vpop.f32.mrf.mxu0
    %v940 = vadd.f32 0.0, %v939
    %941 = vdwg.mxu0
    %v942 = vadd.f32 %v796, %v867
    %v943 = vadd.f32 %v797, %v869
    %v944 = vadd.f32 %v798, %v938
    %v945 = vadd.f32 %v799, %v940
    %v946 = vxor.u32 %v942, 2147483648
    %v947 = vmul.f32 %v946, 1.442695
    %v948 = vpow.pop %v947
    %v949 = vadd.f32 %v948, 1.0
    %v950 = vrcp.pop %v949
    %v951 = vmul.f32 1.0, %v950
    %v952 = vxor.u32 %v943, 2147483648
    %v953 = vmul.f32 %v952, 1.442695
    %v954 = vpow.pop %v953
    %v955 = vadd.f32 %v954, 1.0
    %v956 = vrcp.pop %v955
    %v957 = vmul.f32 1.0, %v956
    %v958 = vtanh.pop %v944
    %v959 = vxor.u32 %v945, 2147483648
    %v960 = vmul.f32 %v959, 1.442695
    %v961 = vpow.pop %v960
    %v962 = vadd.f32 %v961, 1.0
    %v963 = vrcp.pop %v962
    %v964 = vmul.f32 1.0, %v963
    %v965 = vmul.f32 %v957, %v790
    %v966 = vmul.f32 %v951, %v958
    %v967 = vadd.f32 %v965, %v966
    %v968 = vtanh.pop %v967
    %v969 = vmul.f32 %v964, %v968
    %s970 = smul.u32 3, 4
    %s971 = smul.addr %s970, 8
    %s972 = scalar_lea.vmem [#allocation2], %s971
    %v973 = vld [vmem:[%s972] sm:$0xff]
    %v974 = vld [vmem:[%s972 + $0x8] sm:$0xff]
    %v975 = vld [vmem:[%s972 + $0x10] sm:$0xff]
    %v976 = vld [vmem:[%s972 + $0x18] sm:$0xff]
    %977 = vmatprep.subr.mxu0 %v436
    %978 = vmatpush1.msra.mxu0 %v435
    %979 = vmatprep.subr.mxu0 %v432
    %980 = vmatpush1.msra.mxu0 %v431
    %981 = vmatprep.subr.mxu0 %v428
    %982 = vmatpush1.msra.mxu0 %v427
    %983 = vmatprep.subr.mxu0 %v424
    %984 = vmatpush1.msra.mxu0 %v423
    %985 = vmatprep.subr.mxu0 %v420
    %986 = vmatpush1.msra.mxu0 %v419
    %987 = vmatprep.subr.mxu0 %v416
    %988 = vmatpush1.msra.mxu0 %v415
    %989 = vmatprep.subr.mxu0 %v412
    %990 = vmatpush1.msra.mxu0 %v411
    %991 = vmatprep.subr.mxu0 %v408
    %992 = vmatpush1.msra.mxu0 %v407
    %993 = vmatprep.subr.mxu0 %v404
    %994 = vmatpush1.msra.mxu0 %v403
    %995 = vmatprep.subr.mxu0 %v400
    %996 = vmatpush1.msra.mxu0 %v399
    %997 = vmatprep.subr.mxu0 %v396
    %998 = vmatpush1.msra.mxu0 %v395
    %999 = vmatprep.subr.mxu0 %v392
    %1000 = vmatpush1.msra.mxu0 %v391
    %1001 = vmatprep.subr.mxu0 %v388
    %1002 = vmatpush1.msra.mxu0 %v387
    %1003 = vmatprep.subr.mxu0 %v384
    %1004 = vmatpush1.msra.mxu0 %v383
    %1005 = vmatprep.subr.mxu0 %v380
    %1006 = vmatpush1.msra.mxu0 %v379
    %1007 = vmatprep.subr.mxu0 %v376
    %1008 = vmatpush1.msra.mxu0 %v375
    %1009 = vmatprep.subr.mxu0 0.0
    %1010 = vmatpush2.msra.mxu0 0.0
    %1011 = vmatprep.subr.mxu0 0.0
    %1012 = vmatpush2.msra.mxu0 0.0
    %1013 = vmatprep.subr.mxu0 0.0
    %1014 = vmatpush2.msra.mxu0 0.0
    %1015 = vmatprep.subr.mxu0 0.0
    %1016 = vmatpush2.msra.mxu0 0.0
    %1017 = vmatprep.subr.mxu0 0.0
    %1018 = vmatpush2.msra.mxu0 0.0
    %1019 = vmatprep.subr.mxu0 0.0
    %1020 = vmatpush2.msra.mxu0 0.0
    %1021 = vmatprep.subr.mxu0 0.0
    %1022 = vmatpush2.msra.mxu0 0.0
    %1023 = vmatprep.subr.mxu0 0.0
    %1024 = vmatpush2.msra.mxu0 0.0
    %1025 = vmatprep.subr.mxu0 0.0
    %1026 = vmatpush2.msra.mxu0 0.0
    %1027 = vmatprep.subr.mxu0 0.0
    %1028 = vmatpush2.msra.mxu0 0.0
    %1029 = vmatprep.subr.mxu0 0.0
    %1030 = vmatpush2.msra.mxu0 0.0
    %1031 = vmatprep.subr.mxu0 0.0
    %1032 = vmatpush2.msra.mxu0 0.0
    %1033 = vmatprep.subr.mxu0 0.0
    %1034 = vmatpush2.msra.mxu0 0.0
    %1035 = vmatprep.subr.mxu0 0.0
    %1036 = vmatpush2.msra.mxu0 0.0
    %1037 = vmatprep.subr.mxu0 0.0
    %1038 = vmatpush2.msra.mxu0 0.0
    %1039 = vmatprep.subr.mxu0 0.0
    %1040 = vmatpush2.msra.mxu0 0.0
    %1041 = vmatprep.mubr.f32.mxu0 0.0
    %1042 = vmatmul.mubr.f32.gmra.mxu0 %v969
    %v1043 = vpop.f32.mrf.mxu0
    %v1044 = vadd.f32 0.0, %v1043
    %v1045 = vpop.f32.mrf.mxu0
    %v1046 = vadd.f32 0.0, %v1045
    %1047 = vdwg.mxu0
    %1048 = vmatprep.subr.mxu0 %v438
    %1049 = vmatpush1.msra.mxu0 %v437
    %1050 = vmatprep.subr.mxu0 %v434
    %1051 = vmatpush1.msra.mxu0 %v433
    %1052 = vmatprep.subr.mxu0 %v430
    %1053 = vmatpush1.msra.mxu0 %v429
    %1054 = vmatprep.subr.mxu0 %v426
    %1055 = vmatpush1.msra.mxu0 %v425
    %1056 = vmatprep.subr.mxu0 %v422
    %1057 = vmatpush1.msra.mxu0 %v421
    %1058 = vmatprep.subr.mxu0 %v418
    %1059 = vmatpush1.msra.mxu0 %v417
    %1060 = vmatprep.subr.mxu0 %v414
    %1061 = vmatpush1.msra.mxu0 %v413
    %1062 = vmatprep.subr.mxu0 %v410
    %1063 = vmatpush1.msra.mxu0 %v409
    %1064 = vmatprep.subr.mxu0 %v406
    %1065 = vmatpush1.msra.mxu0 %v405
    %1066 = vmatprep.subr.mxu0 %v402
    %1067 = vmatpush1.msra.mxu0 %v401
    %1068 = vmatprep.subr.mxu0 %v398
    %1069 = vmatpush1.msra.mxu0 %v397
    %1070 = vmatprep.subr.mxu0 %v394
    %1071 = vmatpush1.msra.mxu0 %v393
    %1072 = vmatprep.subr.mxu0 %v390
    %1073 = vmatpush1.msra.mxu0 %v389
    %1074 = vmatprep.subr.mxu0 %v386
    %1075 = vmatpush1.msra.mxu0 %v385
    %1076 = vmatprep.subr.mxu0 %v382
    %1077 = vmatpush1.msra.mxu0 %v381
    %1078 = vmatprep.subr.mxu0 %v378
    %1079 = vmatpush1.msra.mxu0 %v377
    %1080 = vmatprep.subr.mxu0 0.0
    %1081 = vmatpush2.msra.mxu0 0.0
    %1082 = vmatprep.subr.mxu0 0.0
    %1083 = vmatpush2.msra.mxu0 0.0
    %1084 = vmatprep.subr.mxu0 0.0
    %1085 = vmatpush2.msra.mxu0 0.0
    %1086 = vmatprep.subr.mxu0 0.0
    %1087 = vmatpush2.msra.mxu0 0.0
    %1088 = vmatprep.subr.mxu0 0.0
    %1089 = vmatpush2.msra.mxu0 0.0
    %1090 = vmatprep.subr.mxu0 0.0
    %1091 = vmatpush2.msra.mxu0 0.0
    %1092 = vmatprep.subr.mxu0 0.0
    %1093 = vmatpush2.msra.mxu0 0.0
    %1094 = vmatprep.subr.mxu0 0.0
    %1095 = vmatpush2.msra.mxu0 0.0
    %1096 = vmatprep.subr.mxu0 0.0
    %1097 = vmatpush2.msra.mxu0 0.0
    %1098 = vmatprep.subr.mxu0 0.0
    %1099 = vmatpush2.msra.mxu0 0.0
    %1100 = vmatprep.subr.mxu0 0.0
    %1101 = vmatpush2.msra.mxu0 0.0
    %1102 = vmatprep.subr.mxu0 0.0
    %1103 = vmatpush2.msra.mxu0 0.0
    %1104 = vmatprep.subr.mxu0 0.0
    %1105 = vmatpush2.msra.mxu0 0.0
    %1106 = vmatprep.subr.mxu0 0.0
    %1107 = vmatpush2.msra.mxu0 0.0
    %1108 = vmatprep.subr.mxu0 0.0
    %1109 = vmatpush2.msra.mxu0 0.0
    %1110 = vmatprep.subr.mxu0 0.0
    %1111 = vmatpush2.msra.mxu0 0.0
    %1112 = vmatprep.mubr.f32.mxu0 0.0
    %1113 = vmatmul.mubr.f32.gmra.mxu0 %v969
    %v1114 = vpop.f32.mrf.mxu0
    %v1115 = vadd.f32 0.0, %v1114
    %v1116 = vpop.f32.mrf.mxu0
    %v1117 = vadd.f32 0.0, %v1116
    %1118 = vdwg.mxu0
    %v1119 = vadd.f32 %v973, %v1044
    %v1120 = vadd.f32 %v974, %v1046
    %v1121 = vadd.f32 %v975, %v1115
    %v1122 = vadd.f32 %v976, %v1117
    %v1123 = vxor.u32 %v1119, 2147483648
    %v1124 = vmul.f32 %v1123, 1.442695
    %v1125 = vpow.pop %v1124
    %v1126 = vadd.f32 %v1125, 1.0
    %v1127 = vrcp.pop %v1126
    %v1128 = vmul.f32 1.0, %v1127
    %v1129 = vxor.u32 %v1120, 2147483648
    %v1130 = vmul.f32 %v1129, 1.442695
    %v1131 = vpow.pop %v1130
    %v1132 = vadd.f32 %v1131, 1.0
    %v1133 = vrcp.pop %v1132
    %v1134 = vmul.f32 1.0, %v1133
    %v1135 = vtanh.pop %v1121
    %v1136 = vxor.u32 %v1122, 2147483648
    %v1137 = vmul.f32 %v1136, 1.442695
    %v1138 = vpow.pop %v1137
    %v1139 = vadd.f32 %v1138, 1.0
    %v1140 = vrcp.pop %v1139
    %v1141 = vmul.f32 1.0, %v1140
    %v1142 = vmul.f32 %v1134, %v967
    %v1143 = vmul.f32 %v1128, %v1135
    %v1144 = vadd.f32 %v1142, %v1143
    %v1145 = vtanh.pop %v1144
    %v1146 = vmul.f32 %v1141, %v1145
    %s1147 = smul.u32 4, 4
    %s1148 = smul.addr %s1147, 8
    %s1149 = scalar_lea.vmem [#allocation2], %s1148
    %v1150 = vld [vmem:[%s1149] sm:$0xff]
    %v1151 = vld [vmem:[%s1149 + $0x8] sm:$0xff]
    %v1152 = vld [vmem:[%s1149 + $0x10] sm:$0xff]
    %v1153 = vld [vmem:[%s1149 + $0x18] sm:$0xff]
    %1154 = vmatprep.subr.mxu0 %v436
    %1155 = vmatpush1.msra.mxu0 %v435
    %1156 = vmatprep.subr.mxu0 %v432
    %1157 = vmatpush1.msra.mxu0 %v431
    %1158 = vmatprep.subr.mxu0 %v428
    %1159 = vmatpush1.msra.mxu0 %v427
    %1160 = vmatprep.subr.mxu0 %v424
    %1161 = vmatpush1.msra.mxu0 %v423
    %1162 = vmatprep.subr.mxu0 %v420
    %1163 = vmatpush1.msra.mxu0 %v419
    %1164 = vmatprep.subr.mxu0 %v416
    %1165 = vmatpush1.msra.mxu0 %v415
    %1166 = vmatprep.subr.mxu0 %v412
    %1167 = vmatpush1.msra.mxu0 %v411
    %1168 = vmatprep.subr.mxu0 %v408
    %1169 = vmatpush1.msra.mxu0 %v407
    %1170 = vmatprep.subr.mxu0 %v404
    %1171 = vmatpush1.msra.mxu0 %v403
    %1172 = vmatprep.subr.mxu0 %v400
    %1173 = vmatpush1.msra.mxu0 %v399
    %1174 = vmatprep.subr.mxu0 %v396
    %1175 = vmatpush1.msra.mxu0 %v395
    %1176 = vmatprep.subr.mxu0 %v392
    %1177 = vmatpush1.msra.mxu0 %v391
    %1178 = vmatprep.subr.mxu0 %v388
    %1179 = vmatpush1.msra.mxu0 %v387
    %1180 = vmatprep.subr.mxu0 %v384
    %1181 = vmatpush1.msra.mxu0 %v383
    %1182 = vmatprep.subr.mxu0 %v380
    %1183 = vmatpush1.msra.mxu0 %v379
    %1184 = vmatprep.subr.mxu0 %v376
    %1185 = vmatpush1.msra.mxu0 %v375
    %1186 = vmatprep.subr.mxu0 0.0
    %1187 = vmatpush2.msra.mxu0 0.0
    %1188 = vmatprep.subr.mxu0 0.0
    %1189 = vmatpush2.msra.mxu0 0.0
    %1190 = vmatprep.subr.mxu0 0.0
    %1191 = vmatpush2.msra.mxu0 0.0
    %1192 = vmatprep.subr.mxu0 0.0
    %1193 = vmatpush2.msra.mxu0 0.0
    %1194 = vmatprep.subr.mxu0 0.0
    %1195 = vmatpush2.msra.mxu0 0.0
    %1196 = vmatprep.subr.mxu0 0.0
    %1197 = vmatpush2.msra.mxu0 0.0
    %1198 = vmatprep.subr.mxu0 0.0
    %1199 = vmatpush2.msra.mxu0 0.0
    %1200 = vmatprep.subr.mxu0 0.0
    %1201 = vmatpush2.msra.mxu0 0.0
    %1202 = vmatprep.subr.mxu0 0.0
    %1203 = vmatpush2.msra.mxu0 0.0
    %1204 = vmatprep.subr.mxu0 0.0
    %1205 = vmatpush2.msra.mxu0 0.0
    %1206 = vmatprep.subr.mxu0 0.0
    %1207 = vmatpush2.msra.mxu0 0.0
    %1208 = vmatprep.subr.mxu0 0.0
    %1209 = vmatpush2.msra.mxu0 0.0
    %1210 = vmatprep.subr.mxu0 0.0
    %1211 = vmatpush2.msra.mxu0 0.0
    %1212 = vmatprep.subr.mxu0 0.0
    %1213 = vmatpush2.msra.mxu0 0.0
    %1214 = vmatprep.subr.mxu0 0.0
    %1215 = vmatpush2.msra.mxu0 0.0
    %1216 = vmatprep.subr.mxu0 0.0
    %1217 = vmatpush2.msra.mxu0 0.0
    %1218 = vmatprep.mubr.f32.mxu0 0.0
    %1219 = vmatmul.mubr.f32.gmra.mxu0 %v1146
    %v1220 = vpop.f32.mrf.mxu0
    %v1221 = vadd.f32 0.0, %v1220
    %v1222 = vpop.f32.mrf.mxu0
    %v1223 = vadd.f32 0.0, %v1222
    %1224 = vdwg.mxu0
    %1225 = vmatprep.subr.mxu0 %v438
    %1226 = vmatpush1.msra.mxu0 %v437
    %1227 = vmatprep.subr.mxu0 %v434
    %1228 = vmatpush1.msra.mxu0 %v433
    %1229 = vmatprep.subr.mxu0 %v430
    %1230 = vmatpush1.msra.mxu0 %v429
    %1231 = vmatprep.subr.mxu0 %v426
    %1232 = vmatpush1.msra.mxu0 %v425
    %1233 = vmatprep.subr.mxu0 %v422
    %1234 = vmatpush1.msra.mxu0 %v421
    %1235 = vmatprep.subr.mxu0 %v418
    %1236 = vmatpush1.msra.mxu0 %v417
    %1237 = vmatprep.subr.mxu0 %v414
    %1238 = vmatpush1.msra.mxu0 %v413
    %1239 = vmatprep.subr.mxu0 %v410
    %1240 = vmatpush1.msra.mxu0 %v409
    %1241 = vmatprep.subr.mxu0 %v406
    %1242 = vmatpush1.msra.mxu0 %v405
    %1243 = vmatprep.subr.mxu0 %v402
    %1244 = vmatpush1.msra.mxu0 %v401
    %1245 = vmatprep.subr.mxu0 %v398
    %1246 = vmatpush1.msra.mxu0 %v397
    %1247 = vmatprep.subr.mxu0 %v394
    %1248 = vmatpush1.msra.mxu0 %v393
    %1249 = vmatprep.subr.mxu0 %v390
    %1250 = vmatpush1.msra.mxu0 %v389
    %1251 = vmatprep.subr.mxu0 %v386
    %1252 = vmatpush1.msra.mxu0 %v385
    %1253 = vmatprep.subr.mxu0 %v382
    %1254 = vmatpush1.msra.mxu0 %v381
    %1255 = vmatprep.subr.mxu0 %v378
    %1256 = vmatpush1.msra.mxu0 %v377
    %1257 = vmatprep.subr.mxu0 0.0
    %1258 = vmatpush2.msra.mxu0 0.0
    %1259 = vmatprep.subr.mxu0 0.0
    %1260 = vmatpush2.msra.mxu0 0.0
    %1261 = vmatprep.subr.mxu0 0.0
    %1262 = vmatpush2.msra.mxu0 0.0
    %1263 = vmatprep.subr.mxu0 0.0
    %1264 = vmatpush2.msra.mxu0 0.0
    %1265 = vmatprep.subr.mxu0 0.0
    %1266 = vmatpush2.msra.mxu0 0.0
    %1267 = vmatprep.subr.mxu0 0.0
    %1268 = vmatpush2.msra.mxu0 0.0
    %1269 = vmatprep.subr.mxu0 0.0
    %1270 = vmatpush2.msra.mxu0 0.0
    %1271 = vmatprep.subr.mxu0 0.0
    %1272 = vmatpush2.msra.mxu0 0.0
    %1273 = vmatprep.subr.mxu0 0.0
    %1274 = vmatpush2.msra.mxu0 0.0
    %1275 = vmatprep.subr.mxu0 0.0
    %1276 = vmatpush2.msra.mxu0 0.0
    %1277 = vmatprep.subr.mxu0 0.0
    %1278 = vmatpush2.msra.mxu0 0.0
    %1279 = vmatprep.subr.mxu0 0.0
    %1280 = vmatpush2.msra.mxu0 0.0
    %1281 = vmatprep.subr.mxu0 0.0
    %1282 = vmatpush2.msra.mxu0 0.0
    %1283 = vmatprep.subr.mxu0 0.0
    %1284 = vmatpush2.msra.mxu0 0.0
    %1285 = vmatprep.subr.mxu0 0.0
    %1286 = vmatpush2.msra.mxu0 0.0
    %1287 = vmatprep.subr.mxu0 0.0
    %1288 = vmatpush2.msra.mxu0 0.0
    %1289 = vmatprep.mubr.f32.mxu0 0.0
    %1290 = vmatmul.mubr.f32.gmra.mxu0 %v1146
    %v1291 = vpop.f32.mrf.mxu0
    %v1292 = vadd.f32 0.0, %v1291
    %v1293 = vpop.f32.mrf.mxu0
    %v1294 = vadd.f32 0.0, %v1293
    %1295 = vdwg.mxu0
    %v1296 = vadd.f32 %v1150, %v1221
    %v1297 = vadd.f32 %v1151, %v1223
    %v1298 = vadd.f32 %v1152, %v1292
    %v1299 = vadd.f32 %v1153, %v1294
    %v1300 = vxor.u32 %v1296, 2147483648
    %v1301 = vmul.f32 %v1300, 1.442695
    %v1302 = vpow.pop %v1301
    %v1303 = vadd.f32 %v1302, 1.0
    %v1304 = vrcp.pop %v1303
    %v1305 = vmul.f32 1.0, %v1304
    %v1306 = vxor.u32 %v1297, 2147483648
    %v1307 = vmul.f32 %v1306, 1.442695
    %v1308 = vpow.pop %v1307
    %v1309 = vadd.f32 %v1308, 1.0
    %v1310 = vrcp.pop %v1309
    %v1311 = vmul.f32 1.0, %v1310
    %v1312 = vtanh.pop %v1298
    %v1313 = vxor.u32 %v1299, 2147483648
    %v1314 = vmul.f32 %v1313, 1.442695
    %v1315 = vpow.pop %v1314
    %v1316 = vadd.f32 %v1315, 1.0
    %v1317 = vrcp.pop %v1316
    %v1318 = vmul.f32 1.0, %v1317
    %v1319 = vmul.f32 %v1311, %v1144
    %v1320 = vmul.f32 %v1305, %v1312
    %v1321 = vadd.f32 %v1319, %v1320
    %v1322 = vtanh.pop %v1321
    %v1323 = vmul.f32 %v1318, %v1322
    %s1324 = smul.u32 5, 4
    %s1325 = smul.addr %s1324, 8
    %s1326 = scalar_lea.vmem [#allocation2], %s1325
    %v1327 = vld [vmem:[%s1326] sm:$0xff]
    %v1328 = vld [vmem:[%s1326 + $0x8] sm:$0xff]
    %v1329 = vld [vmem:[%s1326 + $0x10] sm:$0xff]
    %v1330 = vld [vmem:[%s1326 + $0x18] sm:$0xff]
    %1331 = vmatprep.subr.mxu0 %v436
    %1332 = vmatpush1.msra.mxu0 %v435
    %1333 = vmatprep.subr.mxu0 %v432
    %1334 = vmatpush1.msra.mxu0 %v431
    %1335 = vmatprep.subr.mxu0 %v428
    %1336 = vmatpush1.msra.mxu0 %v427
    %1337 = vmatprep.subr.mxu0 %v424
    %1338 = vmatpush1.msra.mxu0 %v423
    %1339 = vmatprep.subr.mxu0 %v420
    %1340 = vmatpush1.msra.mxu0 %v419
    %1341 = vmatprep.subr.mxu0 %v416
    %1342 = vmatpush1.msra.mxu0 %v415
    %1343 = vmatprep.subr.mxu0 %v412
    %1344 = vmatpush1.msra.mxu0 %v411
    %1345 = vmatprep.subr.mxu0 %v408
    %1346 = vmatpush1.msra.mxu0 %v407
    %1347 = vmatprep.subr.mxu0 %v404
    %1348 = vmatpush1.msra.mxu0 %v403
    %1349 = vmatprep.subr.mxu0 %v400
    %1350 = vmatpush1.msra.mxu0 %v399
    %1351 = vmatprep.subr.mxu0 %v396
    %1352 = vmatpush1.msra.mxu0 %v395
    %1353 = vmatprep.subr.mxu0 %v392
    %1354 = vmatpush1.msra.mxu0 %v391
    %1355 = vmatprep.subr.mxu0 %v388
    %1356 = vmatpush1.msra.mxu0 %v387
    %1357 = vmatprep.subr.mxu0 %v384
    %1358 = vmatpush1.msra.mxu0 %v383
    %1359 = vmatprep.subr.mxu0 %v380
    %1360 = vmatpush1.msra.mxu0 %v379
    %1361 = vmatprep.subr.mxu0 %v376
    %1362 = vmatpush1.msra.mxu0 %v375
    %1363 = vmatprep.subr.mxu0 0.0
    %1364 = vmatpush2.msra.mxu0 0.0
    %1365 = vmatprep.subr.mxu0 0.0
    %1366 = vmatpush2.msra.mxu0 0.0
    %1367 = vmatprep.subr.mxu0 0.0
    %1368 = vmatpush2.msra.mxu0 0.0
    %1369 = vmatprep.subr.mxu0 0.0
    %1370 = vmatpush2.msra.mxu0 0.0
    %1371 = vmatprep.subr.mxu0 0.0
    %1372 = vmatpush2.msra.mxu0 0.0
    %1373 = vmatprep.subr.mxu0 0.0
    %1374 = vmatpush2.msra.mxu0 0.0
    %1375 = vmatprep.subr.mxu0 0.0
    %1376 = vmatpush2.msra.mxu0 0.0
    %1377 = vmatprep.subr.mxu0 0.0
    %1378 = vmatpush2.msra.mxu0 0.0
    %1379 = vmatprep.subr.mxu0 0.0
    %1380 = vmatpush2.msra.mxu0 0.0
    %1381 = vmatprep.subr.mxu0 0.0
    %1382 = vmatpush2.msra.mxu0 0.0
    %1383 = vmatprep.subr.mxu0 0.0
    %1384 = vmatpush2.msra.mxu0 0.0
    %1385 = vmatprep.subr.mxu0 0.0
    %1386 = vmatpush2.msra.mxu0 0.0
    %1387 = vmatprep.subr.mxu0 0.0
    %1388 = vmatpush2.msra.mxu0 0.0
    %1389 = vmatprep.subr.mxu0 0.0
    %1390 = vmatpush2.msra.mxu0 0.0
    %1391 = vmatprep.subr.mxu0 0.0
    %1392 = vmatpush2.msra.mxu0 0.0
    %1393 = vmatprep.subr.mxu0 0.0
    %1394 = vmatpush2.msra.mxu0 0.0
    %1395 = vmatprep.mubr.f32.mxu0 0.0
    %1396 = vmatmul.mubr.f32.gmra.mxu0 %v1323
    %v1397 = vpop.f32.mrf.mxu0
    %v1398 = vadd.f32 0.0, %v1397
    %v1399 = vpop.f32.mrf.mxu0
    %v1400 = vadd.f32 0.0, %v1399
    %1401 = vdwg.mxu0
    %1402 = vmatprep.subr.mxu0 %v438
    %1403 = vmatpush1.msra.mxu0 %v437
    %1404 = vmatprep.subr.mxu0 %v434
    %1405 = vmatpush1.msra.mxu0 %v433
    %1406 = vmatprep.subr.mxu0 %v430
    %1407 = vmatpush1.msra.mxu0 %v429
    %1408 = vmatprep.subr.mxu0 %v426
    %1409 = vmatpush1.msra.mxu0 %v425
    %1410 = vmatprep.subr.mxu0 %v422
    %1411 = vmatpush1.msra.mxu0 %v421
    %1412 = vmatprep.subr.mxu0 %v418
    %1413 = vmatpush1.msra.mxu0 %v417
    %1414 = vmatprep.subr.mxu0 %v414
    %1415 = vmatpush1.msra.mxu0 %v413
    %1416 = vmatprep.subr.mxu0 %v410
    %1417 = vmatpush1.msra.mxu0 %v409
    %1418 = vmatprep.subr.mxu0 %v406
    %1419 = vmatpush1.msra.mxu0 %v405
    %1420 = vmatprep.subr.mxu0 %v402
    %1421 = vmatpush1.msra.mxu0 %v401
    %1422 = vmatprep.subr.mxu0 %v398
    %1423 = vmatpush1.msra.mxu0 %v397
    %1424 = vmatprep.subr.mxu0 %v394
    %1425 = vmatpush1.msra.mxu0 %v393
    %1426 = vmatprep.subr.mxu0 %v390
    %1427 = vmatpush1.msra.mxu0 %v389
    %1428 = vmatprep.subr.mxu0 %v386
    %1429 = vmatpush1.msra.mxu0 %v385
    %1430 = vmatprep.subr.mxu0 %v382
    %1431 = vmatpush1.msra.mxu0 %v381
    %1432 = vmatprep.subr.mxu0 %v378
    %1433 = vmatpush1.msra.mxu0 %v377
    %1434 = vmatprep.subr.mxu0 0.0
    %1435 = vmatpush2.msra.mxu0 0.0
    %1436 = vmatprep.subr.mxu0 0.0
    %1437 = vmatpush2.msra.mxu0 0.0
    %1438 = vmatprep.subr.mxu0 0.0
    %1439 = vmatpush2.msra.mxu0 0.0
    %1440 = vmatprep.subr.mxu0 0.0
    %1441 = vmatpush2.msra.mxu0 0.0
    %1442 = vmatprep.subr.mxu0 0.0
    %1443 = vmatpush2.msra.mxu0 0.0
    %1444 = vmatprep.subr.mxu0 0.0
    %1445 = vmatpush2.msra.mxu0 0.0
    %1446 = vmatprep.subr.mxu0 0.0
    %1447 = vmatpush2.msra.mxu0 0.0
    %1448 = vmatprep.subr.mxu0 0.0
    %1449 = vmatpush2.msra.mxu0 0.0
    %1450 = vmatprep.subr.mxu0 0.0
    %1451 = vmatpush2.msra.mxu0 0.0
    %1452 = vmatprep.subr.mxu0 0.0
    %1453 = vmatpush2.msra.mxu0 0.0
    %1454 = vmatprep.subr.mxu0 0.0
    %1455 = vmatpush2.msra.mxu0 0.0
    %1456 = vmatprep.subr.mxu0 0.0
    %1457 = vmatpush2.msra.mxu0 0.0
    %1458 = vmatprep.subr.mxu0 0.0
    %1459 = vmatpush2.msra.mxu0 0.0
    %1460 = vmatprep.subr.mxu0 0.0
    %1461 = vmatpush2.msra.mxu0 0.0
    %1462 = vmatprep.subr.mxu0 0.0
    %1463 = vmatpush2.msra.mxu0 0.0
    %1464 = vmatprep.subr.mxu0 0.0
    %1465 = vmatpush2.msra.mxu0 0.0
    %1466 = vmatprep.mubr.f32.mxu0 0.0
    %1467 = vmatmul.mubr.f32.gmra.mxu0 %v1323
    %v1468 = vpop.f32.mrf.mxu0
    %v1469 = vadd.f32 0.0, %v1468
    %v1470 = vpop.f32.mrf.mxu0
    %v1471 = vadd.f32 0.0, %v1470
    %1472 = vdwg.mxu0
    %v1473 = vadd.f32 %v1327, %v1398
    %v1474 = vadd.f32 %v1328, %v1400
    %v1475 = vadd.f32 %v1329, %v1469
    %v1476 = vadd.f32 %v1330, %v1471
    %v1477 = vxor.u32 %v1473, 2147483648
    %v1478 = vmul.f32 %v1477, 1.442695
    %v1479 = vpow.pop %v1478
    %v1480 = vadd.f32 %v1479, 1.0
    %v1481 = vrcp.pop %v1480
    %v1482 = vmul.f32 1.0, %v1481
    %v1483 = vxor.u32 %v1474, 2147483648
    %v1484 = vmul.f32 %v1483, 1.442695
    %v1485 = vpow.pop %v1484
    %v1486 = vadd.f32 %v1485, 1.0
    %v1487 = vrcp.pop %v1486
    %v1488 = vmul.f32 1.0, %v1487
    %v1489 = vtanh.pop %v1475
    %v1490 = vxor.u32 %v1476, 2147483648
    %v1491 = vmul.f32 %v1490, 1.442695
    %v1492 = vpow.pop %v1491
    %v1493 = vadd.f32 %v1492, 1.0
    %v1494 = vrcp.pop %v1493
    %v1495 = vmul.f32 1.0, %v1494
    %v1496 = vmul.f32 %v1488, %v1321
    %v1497 = vmul.f32 %v1482, %v1489
    %v1498 = vadd.f32 %v1496, %v1497
    %v1499 = vtanh.pop %v1498
    %v1500 = vmul.f32 %v1495, %v1499
    %s1501 = smul.u32 6, 4
    %s1502 = smul.addr %s1501, 8
    %s1503 = scalar_lea.vmem [#allocation2], %s1502
    %v1504 = vld [vmem:[%s1503] sm:$0xff]
    %v1505 = vld [vmem:[%s1503 + $0x8] sm:$0xff]
    %v1506 = vld [vmem:[%s1503 + $0x10] sm:$0xff]
    %v1507 = vld [vmem:[%s1503 + $0x18] sm:$0xff]
    %1508 = vmatprep.subr.mxu0 %v436
    %1509 = vmatpush1.msra.mxu0 %v435
    %1510 = vmatprep.subr.mxu0 %v432
    %1511 = vmatpush1.msra.mxu0 %v431
    %1512 = vmatprep.subr.mxu0 %v428
    %1513 = vmatpush1.msra.mxu0 %v427
    %1514 = vmatprep.subr.mxu0 %v424
    %1515 = vmatpush1.msra.mxu0 %v423
    %1516 = vmatprep.subr.mxu0 %v420
    %1517 = vmatpush1.msra.mxu0 %v419
    %1518 = vmatprep.subr.mxu0 %v416
    %1519 = vmatpush1.msra.mxu0 %v415
    %1520 = vmatprep.subr.mxu0 %v412
    %1521 = vmatpush1.msra.mxu0 %v411
    %1522 = vmatprep.subr.mxu0 %v408
    %1523 = vmatpush1.msra.mxu0 %v407
    %1524 = vmatprep.subr.mxu0 %v404
    %1525 = vmatpush1.msra.mxu0 %v403
    %1526 = vmatprep.subr.mxu0 %v400
    %1527 = vmatpush1.msra.mxu0 %v399
    %1528 = vmatprep.subr.mxu0 %v396
    %1529 = vmatpush1.msra.mxu0 %v395
    %1530 = vmatprep.subr.mxu0 %v392
    %1531 = vmatpush1.msra.mxu0 %v391
    %1532 = vmatprep.subr.mxu0 %v388
    %1533 = vmatpush1.msra.mxu0 %v387
    %1534 = vmatprep.subr.mxu0 %v384
    %1535 = vmatpush1.msra.mxu0 %v383
    %1536 = vmatprep.subr.mxu0 %v380
    %1537 = vmatpush1.msra.mxu0 %v379
    %1538 = vmatprep.subr.mxu0 %v376
    %1539 = vmatpush1.msra.mxu0 %v375
    %1540 = vmatprep.subr.mxu0 0.0
    %1541 = vmatpush2.msra.mxu0 0.0
    %1542 = vmatprep.subr.mxu0 0.0
    %1543 = vmatpush2.msra.mxu0 0.0
    %1544 = vmatprep.subr.mxu0 0.0
    %1545 = vmatpush2.msra.mxu0 0.0
    %1546 = vmatprep.subr.mxu0 0.0
    %1547 = vmatpush2.msra.mxu0 0.0
    %1548 = vmatprep.subr.mxu0 0.0
    %1549 = vmatpush2.msra.mxu0 0.0
    %1550 = vmatprep.subr.mxu0 0.0
    %1551 = vmatpush2.msra.mxu0 0.0
    %1552 = vmatprep.subr.mxu0 0.0
    %1553 = vmatpush2.msra.mxu0 0.0
    %1554 = vmatprep.subr.mxu0 0.0
    %1555 = vmatpush2.msra.mxu0 0.0
    %1556 = vmatprep.subr.mxu0 0.0
    %1557 = vmatpush2.msra.mxu0 0.0
    %1558 = vmatprep.subr.mxu0 0.0
    %1559 = vmatpush2.msra.mxu0 0.0
    %1560 = vmatprep.subr.mxu0 0.0
    %1561 = vmatpush2.msra.mxu0 0.0
    %1562 = vmatprep.subr.mxu0 0.0
    %1563 = vmatpush2.msra.mxu0 0.0
    %1564 = vmatprep.subr.mxu0 0.0
    %1565 = vmatpush2.msra.mxu0 0.0
    %1566 = vmatprep.subr.mxu0 0.0
    %1567 = vmatpush2.msra.mxu0 0.0
    %1568 = vmatprep.subr.mxu0 0.0
    %1569 = vmatpush2.msra.mxu0 0.0
    %1570 = vmatprep.subr.mxu0 0.0
    %1571 = vmatpush2.msra.mxu0 0.0
    %1572 = vmatprep.mubr.f32.mxu0 0.0
    %1573 = vmatmul.mubr.f32.gmra.mxu0 %v1500
    %v1574 = vpop.f32.mrf.mxu0
    %v1575 = vadd.f32 0.0, %v1574
    %v1576 = vpop.f32.mrf.mxu0
    %v1577 = vadd.f32 0.0, %v1576
    %1578 = vdwg.mxu0
    %1579 = vmatprep.subr.mxu0 %v438
    %1580 = vmatpush1.msra.mxu0 %v437
    %1581 = vmatprep.subr.mxu0 %v434
    %1582 = vmatpush1.msra.mxu0 %v433
    %1583 = vmatprep.subr.mxu0 %v430
    %1584 = vmatpush1.msra.mxu0 %v429
    %1585 = vmatprep.subr.mxu0 %v426
    %1586 = vmatpush1.msra.mxu0 %v425
    %1587 = vmatprep.subr.mxu0 %v422
    %1588 = vmatpush1.msra.mxu0 %v421
    %1589 = vmatprep.subr.mxu0 %v418
    %1590 = vmatpush1.msra.mxu0 %v417
    %1591 = vmatprep.subr.mxu0 %v414
    %1592 = vmatpush1.msra.mxu0 %v413
    %1593 = vmatprep.subr.mxu0 %v410
    %1594 = vmatpush1.msra.mxu0 %v409
    %1595 = vmatprep.subr.mxu0 %v406
    %1596 = vmatpush1.msra.mxu0 %v405
    %1597 = vmatprep.subr.mxu0 %v402
    %1598 = vmatpush1.msra.mxu0 %v401
    %1599 = vmatprep.subr.mxu0 %v398
    %1600 = vmatpush1.msra.mxu0 %v397
    %1601 = vmatprep.subr.mxu0 %v394
    %1602 = vmatpush1.msra.mxu0 %v393
    %1603 = vmatprep.subr.mxu0 %v390
    %1604 = vmatpush1.msra.mxu0 %v389
    %1605 = vmatprep.subr.mxu0 %v386
    %1606 = vmatpush1.msra.mxu0 %v385
    %1607 = vmatprep.subr.mxu0 %v382
    %1608 = vmatpush1.msra.mxu0 %v381
    %1609 = vmatprep.subr.mxu0 %v378
    %1610 = vmatpush1.msra.mxu0 %v377
    %1611 = vmatprep.subr.mxu0 0.0
    %1612 = vmatpush2.msra.mxu0 0.0
    %1613 = vmatprep.subr.mxu0 0.0
    %1614 = vmatpush2.msra.mxu0 0.0
    %1615 = vmatprep.subr.mxu0 0.0
    %1616 = vmatpush2.msra.mxu0 0.0
    %1617 = vmatprep.subr.mxu0 0.0
    %1618 = vmatpush2.msra.mxu0 0.0
    %1619 = vmatprep.subr.mxu0 0.0
    %1620 = vmatpush2.msra.mxu0 0.0
    %1621 = vmatprep.subr.mxu0 0.0
    %1622 = vmatpush2.msra.mxu0 0.0
    %1623 = vmatprep.subr.mxu0 0.0
    %1624 = vmatpush2.msra.mxu0 0.0
    %1625 = vmatprep.subr.mxu0 0.0
    %1626 = vmatpush2.msra.mxu0 0.0
    %1627 = vmatprep.subr.mxu0 0.0
    %1628 = vmatpush2.msra.mxu0 0.0
    %1629 = vmatprep.subr.mxu0 0.0
    %1630 = vmatpush2.msra.mxu0 0.0
    %1631 = vmatprep.subr.mxu0 0.0
    %1632 = vmatpush2.msra.mxu0 0.0
    %1633 = vmatprep.subr.mxu0 0.0
    %1634 = vmatpush2.msra.mxu0 0.0
    %1635 = vmatprep.subr.mxu0 0.0
    %1636 = vmatpush2.msra.mxu0 0.0
    %1637 = vmatprep.subr.mxu0 0.0
    %1638 = vmatpush2.msra.mxu0 0.0
    %1639 = vmatprep.subr.mxu0 0.0
    %1640 = vmatpush2.msra.mxu0 0.0
    %1641 = vmatprep.subr.mxu0 0.0
    %1642 = vmatpush2.msra.mxu0 0.0
    %1643 = vmatprep.mubr.f32.mxu0 0.0
    %1644 = vmatmul.mubr.f32.gmra.mxu0 %v1500
    %v1645 = vpop.f32.mrf.mxu0
    %v1646 = vadd.f32 0.0, %v1645
    %v1647 = vpop.f32.mrf.mxu0
    %v1648 = vadd.f32 0.0, %v1647
    %1649 = vdwg.mxu0
    %v1650 = vadd.f32 %v1504, %v1575
    %v1651 = vadd.f32 %v1505, %v1577
    %v1652 = vadd.f32 %v1506, %v1646
    %v1653 = vadd.f32 %v1507, %v1648
    %v1654 = vxor.u32 %v1650, 2147483648
    %v1655 = vmul.f32 %v1654, 1.442695
    %v1656 = vpow.pop %v1655
    %v1657 = vadd.f32 %v1656, 1.0
    %v1658 = vrcp.pop %v1657
    %v1659 = vmul.f32 1.0, %v1658
    %v1660 = vxor.u32 %v1651, 2147483648
    %v1661 = vmul.f32 %v1660, 1.442695
    %v1662 = vpow.pop %v1661
    %v1663 = vadd.f32 %v1662, 1.0
    %v1664 = vrcp.pop %v1663
    %v1665 = vmul.f32 1.0, %v1664
    %v1666 = vtanh.pop %v1652
    %v1667 = vxor.u32 %v1653, 2147483648
    %v1668 = vmul.f32 %v1667, 1.442695
    %v1669 = vpow.pop %v1668
    %v1670 = vadd.f32 %v1669, 1.0
    %v1671 = vrcp.pop %v1670
    %v1672 = vmul.f32 1.0, %v1671
    %v1673 = vmul.f32 %v1665, %v1498
    %v1674 = vmul.f32 %v1659, %v1666
    %v1675 = vadd.f32 %v1673, %v1674
    %v1676 = vtanh.pop %v1675
    %v1677 = vmul.f32 %v1672, %v1676
    %s1678 = smul.u32 7, 4
    %s1679 = smul.addr %s1678, 8
    %s1680 = scalar_lea.vmem [#allocation2], %s1679
    %v1681 = vld [vmem:[%s1680] sm:$0xff]
    %v1682 = vld [vmem:[%s1680 + $0x8] sm:$0xff]
    %v1683 = vld [vmem:[%s1680 + $0x10] sm:$0xff]
    %v1684 = vld [vmem:[%s1680 + $0x18] sm:$0xff]
    %1685 = vmatprep.subr.mxu0 %v436
    %1686 = vmatpush1.msra.mxu0 %v435
    %1687 = vmatprep.subr.mxu0 %v432
    %1688 = vmatpush1.msra.mxu0 %v431
    %1689 = vmatprep.subr.mxu0 %v428
    %1690 = vmatpush1.msra.mxu0 %v427
    %1691 = vmatprep.subr.mxu0 %v424
    %1692 = vmatpush1.msra.mxu0 %v423
    %1693 = vmatprep.subr.mxu0 %v420
    %1694 = vmatpush1.msra.mxu0 %v419
    %1695 = vmatprep.subr.mxu0 %v416
    %1696 = vmatpush1.msra.mxu0 %v415
    %1697 = vmatprep.subr.mxu0 %v412
    %1698 = vmatpush1.msra.mxu0 %v411
    %1699 = vmatprep.subr.mxu0 %v408
    %1700 = vmatpush1.msra.mxu0 %v407
    %1701 = vmatprep.subr.mxu0 %v404
    %1702 = vmatpush1.msra.mxu0 %v403
    %1703 = vmatprep.subr.mxu0 %v400
    %1704 = vmatpush1.msra.mxu0 %v399
    %1705 = vmatprep.subr.mxu0 %v396
    %1706 = vmatpush1.msra.mxu0 %v395
    %1707 = vmatprep.subr.mxu0 %v392
    %1708 = vmatpush1.msra.mxu0 %v391
    %1709 = vmatprep.subr.mxu0 %v388
    %1710 = vmatpush1.msra.mxu0 %v387
    %1711 = vmatprep.subr.mxu0 %v384
    %1712 = vmatpush1.msra.mxu0 %v383
    %1713 = vmatprep.subr.mxu0 %v380
    %1714 = vmatpush1.msra.mxu0 %v379
    %1715 = vmatprep.subr.mxu0 %v376
    %1716 = vmatpush1.msra.mxu0 %v375
    %1717 = vmatprep.subr.mxu0 0.0
    %1718 = vmatpush2.msra.mxu0 0.0
    %1719 = vmatprep.subr.mxu0 0.0
    %1720 = vmatpush2.msra.mxu0 0.0
    %1721 = vmatprep.subr.mxu0 0.0
    %1722 = vmatpush2.msra.mxu0 0.0
    %1723 = vmatprep.subr.mxu0 0.0
    %1724 = vmatpush2.msra.mxu0 0.0
    %1725 = vmatprep.subr.mxu0 0.0
    %1726 = vmatpush2.msra.mxu0 0.0
    %1727 = vmatprep.subr.mxu0 0.0
    %1728 = vmatpush2.msra.mxu0 0.0
    %1729 = vmatprep.subr.mxu0 0.0
    %1730 = vmatpush2.msra.mxu0 0.0
    %1731 = vmatprep.subr.mxu0 0.0
    %1732 = vmatpush2.msra.mxu0 0.0
    %1733 = vmatprep.subr.mxu0 0.0
    %1734 = vmatpush2.msra.mxu0 0.0
    %1735 = vmatprep.subr.mxu0 0.0
    %1736 = vmatpush2.msra.mxu0 0.0
    %1737 = vmatprep.subr.mxu0 0.0
    %1738 = vmatpush2.msra.mxu0 0.0
    %1739 = vmatprep.subr.mxu0 0.0
    %1740 = vmatpush2.msra.mxu0 0.0
    %1741 = vmatprep.subr.mxu0 0.0
    %1742 = vmatpush2.msra.mxu0 0.0
    %1743 = vmatprep.subr.mxu0 0.0
    %1744 = vmatpush2.msra.mxu0 0.0
    %1745 = vmatprep.subr.mxu0 0.0
    %1746 = vmatpush2.msra.mxu0 0.0
    %1747 = vmatprep.subr.mxu0 0.0
    %1748 = vmatpush2.msra.mxu0 0.0
    %1749 = vmatprep.mubr.f32.mxu0 0.0
    %1750 = vmatmul.mubr.f32.gmra.mxu0 %v1677
    %v1751 = vpop.f32.mrf.mxu0
    %v1752 = vadd.f32 0.0, %v1751
    %v1753 = vpop.f32.mrf.mxu0
    %v1754 = vadd.f32 0.0, %v1753
    %1755 = vdwg.mxu0
    %1756 = vmatprep.subr.mxu0 %v438
    %1757 = vmatpush1.msra.mxu0 %v437
    %1758 = vmatprep.subr.mxu0 %v434
    %1759 = vmatpush1.msra.mxu0 %v433
    %1760 = vmatprep.subr.mxu0 %v430
    %1761 = vmatpush1.msra.mxu0 %v429
    %1762 = vmatprep.subr.mxu0 %v426
    %1763 = vmatpush1.msra.mxu0 %v425
    %1764 = vmatprep.subr.mxu0 %v422
    %1765 = vmatpush1.msra.mxu0 %v421
    %1766 = vmatprep.subr.mxu0 %v418
    %1767 = vmatpush1.msra.mxu0 %v417
    %1768 = vmatprep.subr.mxu0 %v414
    %1769 = vmatpush1.msra.mxu0 %v413
    %1770 = vmatprep.subr.mxu0 %v410
    %1771 = vmatpush1.msra.mxu0 %v409
    %1772 = vmatprep.subr.mxu0 %v406
    %1773 = vmatpush1.msra.mxu0 %v405
    %1774 = vmatprep.subr.mxu0 %v402
    %1775 = vmatpush1.msra.mxu0 %v401
    %1776 = vmatprep.subr.mxu0 %v398
    %1777 = vmatpush1.msra.mxu0 %v397
    %1778 = vmatprep.subr.mxu0 %v394
    %1779 = vmatpush1.msra.mxu0 %v393
    %1780 = vmatprep.subr.mxu0 %v390
    %1781 = vmatpush1.msra.mxu0 %v389
    %1782 = vmatprep.subr.mxu0 %v386
    %1783 = vmatpush1.msra.mxu0 %v385
    %1784 = vmatprep.subr.mxu0 %v382
    %1785 = vmatpush1.msra.mxu0 %v381
    %1786 = vmatprep.subr.mxu0 %v378
    %1787 = vmatpush1.msra.mxu0 %v377
    %1788 = vmatprep.subr.mxu0 0.0
    %1789 = vmatpush2.msra.mxu0 0.0
    %1790 = vmatprep.subr.mxu0 0.0
    %1791 = vmatpush2.msra.mxu0 0.0
    %1792 = vmatprep.subr.mxu0 0.0
    %1793 = vmatpush2.msra.mxu0 0.0
    %1794 = vmatprep.subr.mxu0 0.0
    %1795 = vmatpush2.msra.mxu0 0.0
    %1796 = vmatprep.subr.mxu0 0.0
    %1797 = vmatpush2.msra.mxu0 0.0
    %1798 = vmatprep.subr.mxu0 0.0
    %1799 = vmatpush2.msra.mxu0 0.0
    %1800 = vmatprep.subr.mxu0 0.0
    %1801 = vmatpush2.msra.mxu0 0.0
    %1802 = vmatprep.subr.mxu0 0.0
    %1803 = vmatpush2.msra.mxu0 0.0
    %1804 = vmatprep.subr.mxu0 0.0
    %1805 = vmatpush2.msra.mxu0 0.0
    %1806 = vmatprep.subr.mxu0 0.0
    %1807 = vmatpush2.msra.mxu0 0.0
    %1808 = vmatprep.subr.mxu0 0.0
    %1809 = vmatpush2.msra.mxu0 0.0
    %1810 = vmatprep.subr.mxu0 0.0
    %1811 = vmatpush2.msra.mxu0 0.0
    %1812 = vmatprep.subr.mxu0 0.0
    %1813 = vmatpush2.msra.mxu0 0.0
    %1814 = vmatprep.subr.mxu0 0.0
    %1815 = vmatpush2.msra.mxu0 0.0
    %1816 = vmatprep.subr.mxu0 0.0
    %1817 = vmatpush2.msra.mxu0 0.0
    %1818 = vmatprep.subr.mxu0 0.0
    %1819 = vmatpush2.msra.mxu0 0.0
    %1820 = vmatprep.mubr.f32.mxu0 0.0
    %1821 = vmatmul.mubr.f32.gmra.mxu0 %v1677
    %v1822 = vpop.f32.mrf.mxu0
    %v1823 = vadd.f32 0.0, %v1822
    %v1824 = vpop.f32.mrf.mxu0
    %v1825 = vadd.f32 0.0, %v1824
    %1826 = vdwg.mxu0
    %v1827 = vadd.f32 %v1681, %v1752
    %v1828 = vadd.f32 %v1682, %v1754
    %v1829 = vadd.f32 %v1683, %v1823
    %v1830 = vadd.f32 %v1684, %v1825
    %v1831 = vxor.u32 %v1827, 2147483648
    %v1832 = vmul.f32 %v1831, 1.442695
    %v1833 = vpow.pop %v1832
    %v1834 = vadd.f32 %v1833, 1.0
    %v1835 = vrcp.pop %v1834
    %v1836 = vmul.f32 1.0, %v1835
    %v1837 = vxor.u32 %v1828, 2147483648
    %v1838 = vmul.f32 %v1837, 1.442695
    %v1839 = vpow.pop %v1838
    %v1840 = vadd.f32 %v1839, 1.0
    %v1841 = vrcp.pop %v1840
    %v1842 = vmul.f32 1.0, %v1841
    %v1843 = vtanh.pop %v1829
    %v1844 = vxor.u32 %v1830, 2147483648
    %v1845 = vmul.f32 %v1844, 1.442695
    %v1846 = vpow.pop %v1845
    %v1847 = vadd.f32 %v1846, 1.0
    %v1848 = vrcp.pop %v1847
    %v1849 = vmul.f32 1.0, %v1848
    %v1850 = vmul.f32 %v1842, %v1675
    %v1851 = vmul.f32 %v1836, %v1843
    %v1852 = vadd.f32 %v1850, %v1851
    %v1853 = vtanh.pop %v1852
    %v1854 = vmul.f32 %v1849, %v1853
    %1855 = vst [vmem:[#allocation8] sm:$0xff] %v1854
    // Predicated region
    $region26: #{tpu_custom_call.1} parent=1 // pred_check
      _
    $region27: #{tpu_custom_call.1} parent=1 // pred_check_branch
      %1857 = sbr.rel (0) target = $region29
    $region28: #{tpu_custom_call.1} parent=1 // pred_region
      %s1859 = ssub.s32 128, 128
      %1860 = vsyncadd [#allocation5], %s1859
      %s1862 = sshll.u32 [#allocation8], 4
      %s1863 = int_to_ptr.vmem [resolvable:$true] %s1862
      %1865 = dma.vmem_to_hbm [thread:$0]  %s1863, 128, %s4, [#allocation5]
    $region29: #{tpu_custom_call.1} parent=1 // pred_fallthru
      _
    // Predicated region
    $region30: #{tpu_custom_call.1} parent=1 // pred_check
      _
    $region31: #{tpu_custom_call.1} parent=1 // pred_check_branch
      %1867 = sbr.rel (0) target = $region33
    $region32: #{tpu_custom_call.1} parent=1 // pred_region
      %1868 = dma.done [#allocation5], 128
    $region33: #{tpu_custom_call.1} parent=1 // pred_fallthru
      _
    %1869 = vsyncpa [#allocation4], 1
    %1870 = vsyncpa [#allocation7], 1
    %1871 = vsyncpa [#allocation5], 1

</llo_original>
